<compile_context>
chip_gen: v7x
topology: tpu7x:2x2x1
jax: 0.10.0
libtpu: 0.0.40
codegen_flags: <defaults>
</compile_context>

<pallas_src>
import functools

import jax
import jax.numpy as jnp
import numpy as np
from jax import lax
from jax.experimental import pallas as pl
from jax.experimental.pallas import tpu as pltpu


def _round_up(x: int, m: int) -> int:
    return (x + m - 1) // m * m


def _pick_batch_block(b_s: int, nq: int, nk: int, *, target_rows: int = 512,
                      min_grid: int = 2) -> int:
    """Block enough batch elements to put ~target_rows rows in the projection GEMM,
    while keeping >= min_grid grid steps when the batch allows it (v7x megacore)."""
    rows = max(nq, nk, 1)
    b_blk = max(1, min(b_s, max(1, target_rows // rows)))
    if b_s >= min_grid:
        while b_blk > 1 and -(-b_s // b_blk) < min_grid:
            b_blk -= 1
    return b_blk


def _attention_kernel(q_ref, k_ref, v_ref, w_ref, b_ref, o_ref, *,
                      head: int, d_kv_pad: int, nq: int, nk: int, nk_real: int,
                      b_blk: int, fast: bool):
    """One grid step = b_blk batch elements; all heads computed inside."""
    d_in = q_ref.shape[-1]
    d_out = head * d_kv_pad
    compute_dtype = jnp.bfloat16 if fast else jnp.float32

    # Flatten (b_blk, seq, d_in) -> (b_blk*seq, d_in): fills the M dim of the
    # projection GEMM (seq is a multiple of 8 -> zero-cost view).
    q_in = q_ref[...].reshape(b_blk * nq, d_in)
    k_in = k_ref[...].reshape(b_blk * nk, d_in)
    v_in = v_ref[...].reshape(b_blk * nk, d_in)

    # Projections: weights already (in, out) with 128-aligned head stripes; scale and
    # bias for q already folded in the wrapper.  f32 accumulation on the MXU.
    qf = jnp.dot(q_in, w_ref[0], preferred_element_type=jnp.float32) + b_ref[0]
    kf = jnp.dot(k_in, w_ref[1], preferred_element_type=jnp.float32) + b_ref[1]
    vf = jnp.dot(v_in, w_ref[2], preferred_element_type=jnp.float32) + b_ref[2]

    q_c = qf.reshape(b_blk, nq, d_out).astype(compute_dtype)
    k_c = kf.reshape(b_blk, nk, d_out).astype(compute_dtype)
    v_c = vf.reshape(b_blk, nk, d_out).astype(compute_dtype)

    head_outs = []
    for h in range(head):                      # short static loop; slices are
        lo = h * d_kv_pad                      # 128-lane-aligned stripes (no relayout)
        qh = q_c[:, :, lo:lo + d_kv_pad]       # (b_blk, nq, d_kv_pad)
        kh = k_c[:, :, lo:lo + d_kv_pad]       # (b_blk, nk, d_kv_pad)
        vh = v_c[:, :, lo:lo + d_kv_pad]       # (b_blk, nk, d_kv_pad)

        # Batched q @ k^T over the block's batch dim (scale folded into Wq/bq).
        att = jnp.einsum('bqd,bkd->bqk', qh, kh,
                         preferred_element_type=jnp.float32)     # (b_blk, nq, nk)

        if nk_real != nk:   # mask key-padding columns (only traced when padding exists)
            col = lax.broadcasted_iota(jnp.int32, att.shape, 2)
            att = jnp.where(col < nk_real, att, jnp.float32(-1e30))

        # Numerically stable softmax in f32; EUP reciprocal in fast mode.
        att = att - jnp.max(att, axis=-1, keepdims=True)
        p = jnp.exp(att)
        p = p * pl.reciprocal(jnp.sum(p, axis=-1, keepdims=True), approx=fast)

        head_outs.append(jnp.einsum('bqk,bkd->bqd', p.astype(compute_dtype), vh,
                                    preferred_element_type=jnp.float32))

    # Lane-aligned head concat + single lane-dense store of the whole block.
    out = head_outs[0] if head == 1 else jnp.concatenate(head_outs, axis=-1)
    o_ref[...] = out.astype(o_ref.dtype)


def _stripe_weight(w_t, head: int, d_kv: int, d_kv_pad: int):
    """(d_in, head*d_kv) -> (d_in, head*d_kv_pad) with zero-padded 128-aligned stripes."""
    if d_kv_pad == d_kv:
        return w_t
    d_in = w_t.shape[0]
    w3 = w_t.reshape(d_in, head, d_kv)
    w3 = jnp.pad(w3, ((0, 0), (0, 0), (0, d_kv_pad - d_kv)))
    return w3.reshape(d_in, head * d_kv_pad)


def _stripe_bias(b, head: int, d_kv: int, d_kv_pad: int):
    if d_kv_pad == d_kv:
        return b
    b2 = b.reshape(head, d_kv)
    b2 = jnp.pad(b2, ((0, 0), (0, d_kv_pad - d_kv)))
    return b2.reshape(head * d_kv_pad)


def scaled_dot_product_attention(queries, keys, values, attention_mask, params, *,
                                 head: int, fast_math: bool = True):
    """Pallas implementation of the module's forward.

    WARNING: `attention_mask` is ignored on purpose — the reference forward's
    masked_fill result is discarded, so the mask has no effect on the output.
    If the reference module is ever fixed, real masking must be added here.
    """
    del attention_mask
    b_s, nq, d_model = queries.shape
    nk = keys.shape[1]
    assert d_model % head == 0
    d_kv = d_model // head
    out_dtype = queries.dtype

    scale = float(1.0 / np.sqrt(d_kv))

    wq = params["wq"].astype(jnp.float32)
    bq = params["bq"].astype(jnp.float32)
    wk = params["wk"].astype(jnp.float32)
    bk = params["bk"].astype(jnp.float32)
    wv = params["wv"].astype(jnp.float32)
    bv = params["bv"].astype(jnp.float32)

    # Pre-transpose to (in, out), fold the attention scale into the q projection,
    # and stripe each head's output columns into a 128-lane-aligned slot.
    d_kv_pad = d_kv if d_kv % 128 == 0 else _round_up(d_kv, 128)
    d_out = head * d_kv_pad

    wq_s = _stripe_weight(wq.T * scale, head, d_kv, d_kv_pad)
    wk_s = _stripe_weight(wk.T, head, d_kv, d_kv_pad)
    wv_s = _stripe_weight(wv.T, head, d_kv, d_kv_pad)
    bq_s = _stripe_bias(bq * scale, head, d_kv, d_kv_pad)
    bk_s = _stripe_bias(bk, head, d_kv, d_kv_pad)
    bv_s = _stripe_bias(bv, head, d_kv, d_kv_pad)

    w_all = jnp.stack([wq_s, wk_s, wv_s], axis=0)                 # (3, d_model, d_out)
    b_all = jnp.stack([bq_s, bk_s, bv_s], axis=0)[:, None, :]     # (3, 1, d_out) f32

    # Sequence padding to sublane multiples; batch blocking + batch padding.
    nq_pad = _round_up(nq, 8)
    nk_pad = _round_up(nk, 8)
    b_blk = _pick_batch_block(b_s, nq_pad, nk_pad)
    b_s_pad = _round_up(b_s, b_blk)
    grid = (b_s_pad // b_blk,)

    def _pad_act(x, n_pad):
        pb, pn = b_s_pad - b_s, n_pad - x.shape[1]
        if pb or pn:
            x = jnp.pad(x, ((0, pb), (0, pn), (0, 0)))
        return x

    qp = _pad_act(queries, nq_pad)
    kp = _pad_act(keys, nk_pad)
    vp = _pad_act(values, nk_pad)

    # bf16 MXU inputs in fast mode (f32 accumulation in the kernel); biases stay f32.
    in_dtype = jnp.bfloat16 if fast_math else jnp.float32
    qp = qp.astype(in_dtype)
    kp = kp.astype(in_dtype)
    vp = vp.astype(in_dtype)
    w_all = w_all.astype(in_dtype)

    kernel = functools.partial(_attention_kernel, head=head, d_kv_pad=d_kv_pad,
                               nq=nq_pad, nk=nk_pad, nk_real=nk, b_blk=b_blk,
                               fast=fast_math)

    # Rough VMEM budget (resident weights + double-buffered activation/output blocks);
    # raise the scoped limit only when the default 32 MiB would not fit.
    in_b = jnp.dtype(in_dtype).itemsize
    out_b = jnp.dtype(out_dtype).itemsize
    est_bytes = (3 * d_model * d_out * in_b + 3 * d_out * 4
                 + 2 * b_blk * (nq_pad + 2 * nk_pad) * d_model * in_b
                 + 2 * b_blk * nq_pad * d_out * out_b
                 + (4 << 20))
    vmem_limit = None
    if est_bytes > (32 << 20):
        vmem_limit = min(est_bytes + (8 << 20), 128 << 20)

    out_raw = pl.pallas_call(
        kernel,
        out_shape=jax.ShapeDtypeStruct((b_s_pad, nq_pad, d_out), out_dtype),
        grid=grid,
        in_specs=[
            pl.BlockSpec((b_blk, nq_pad, d_model), lambda i: (i, 0, 0)),   # queries
            pl.BlockSpec((b_blk, nk_pad, d_model), lambda i: (i, 0, 0)),   # keys
            pl.BlockSpec((b_blk, nk_pad, d_model), lambda i: (i, 0, 0)),   # values
            pl.BlockSpec((3, d_model, d_out), lambda i: (0, 0, 0)),        # stacked W (in,out)
            pl.BlockSpec((3, 1, d_out), lambda i: (0, 0, 0)),              # stacked biases
        ],
        out_specs=pl.BlockSpec((b_blk, nq_pad, d_out), lambda i: (i, 0, 0)),
        compiler_params=pltpu.CompilerParams(
            dimension_semantics=("parallel",),
            vmem_limit_bytes=vmem_limit),
    )(qp, kp, vp, w_all, b_all)

    # Strip batch/sequence padding and compact the per-head 128-lane stripes.
    out = out_raw[:b_s, :nq]
    if d_kv_pad != d_kv:
        out = out.reshape(b_s, nq, head, d_kv_pad)[..., :d_kv].reshape(b_s, nq, d_model)
    return out


def _reference(queries, keys, values, params, *, head: int):
    """Plain-JAX reference mirroring the PyTorch forward (mask no-op)."""
    b_s, nq, d_model = queries.shape
    nk = keys.shape[1]
    d_kv = d_model // head
    q = (queries @ params["wq"].T + params["bq"]).reshape(b_s, nq, head, d_kv).transpose(0, 2, 1, 3)
    k = (keys @ params["wk"].T + params["bk"]).reshape(b_s, nk, head, d_kv).transpose(0, 2, 3, 1)
    v = (values @ params["wv"].T + params["bv"]).reshape(b_s, nk, head, d_kv).transpose(0, 2, 1, 3)
    att = (q @ k) / np.sqrt(d_kv)
    att = jax.nn.softmax(att, axis=-1)
    out = (att @ v).transpose(0, 2, 1, 3).reshape(b_s, -1, d_model)
    return out


if __name__ == "__main__":
    head = 4
    d_model = 32
    b_s, nq, nk = 2, 8, 8

    key = jax.random.PRNGKey(0)
    ks = jax.random.split(key, 10)

    bound = 1.0 / np.sqrt(d_model)  # PyTorch nn.Linear default init range
    params = {
        "wq": jax.random.uniform(ks[0], (d_model, d_model), jnp.float32, -bound, bound),
        "bq": jax.random.uniform(ks[1], (d_model,), jnp.float32, -bound, bound),
        "wk": jax.random.uniform(ks[2], (d_model, d_model), jnp.float32, -bound, bound),
        "bk": jax.random.uniform(ks[3], (d_model,), jnp.float32, -bound, bound),
        "wv": jax.random.uniform(ks[4], (d_model, d_model), jnp.float32, -bound, bound),
        "bv": jax.random.uniform(ks[5], (d_model,), jnp.float32, -bound, bound),
    }

    queries = jax.random.normal(ks[6], (b_s, nq, d_model), jnp.float32)
    keys_in = jax.random.normal(ks[7], (b_s, nk, d_model), jnp.float32)
    values = jax.random.normal(ks[8], (b_s, nk, d_model), jnp.float32)
    attention_mask = None  # ignored: reference forward's masked_fill is non-in-place

    ref = _reference(queries, keys_in, values, params, head=head)

    # Precise path: f32 MXU inputs + exact reciprocal — tight tolerance.
    out_f32 = scaled_dot_product_attention(queries, keys_in, values, attention_mask,
                                           params, head=head, fast_math=False)
    out_f32 = jax.block_until_ready(out_f32)
    np.testing.assert_allclose(np.asarray(out_f32), np.asarray(ref), rtol=1e-4, atol=1e-4)

    # Fast path (default): bf16 MXU inputs + approx reciprocal — relaxed tolerance.
    out_fast = scaled_dot_product_attention(queries, keys_in, values, attention_mask,
                                            params, head=head, fast_math=True)
    out_fast = jax.block_until_ready(out_fast)
    np.testing.assert_allclose(np.asarray(out_fast), np.asarray(ref), rtol=5e-2, atol=5e-2)

    print("KERNEL_OK")
</pallas_src>

<mosaic_0001>
module attributes {stable_mosaic.version = 11 : i64} {
  func.func @_attention_kernel(%arg0: i32, %arg1: memref<1x8x32xf32, #tpu.memory_space<vmem>>, %arg2: memref<1x8x32xf32, #tpu.memory_space<vmem>>, %arg3: memref<1x8x32xf32, #tpu.memory_space<vmem>>, %arg4: memref<3x32x512xf32, #tpu.memory_space<vmem>>, %arg5: memref<3x1x512xf32, #tpu.memory_space<vmem>>, %arg6: memref<1x8x512xf32, #tpu.memory_space<vmem>>) attributes {dimension_semantics = [#tpu.dimension_semantics<parallel>], iteration_bounds = array<i64: 2>, scalar_prefetch = 0 : i64, scratch_operands = 0 : i64, tpu.core_type = #tpu.core_type<tc>, window_params = [{transform_indices = @transform_0, window_bounds = array<i64: 1, 8, 32>}, {transform_indices = @transform_1, window_bounds = array<i64: 1, 8, 32>}, {transform_indices = @transform_2, window_bounds = array<i64: 1, 8, 32>}, {pipeline_mode = #tpu.pipeline_mode<synchronous>, transform_indices = @transform_3, window_bounds = array<i64: 3, 32, 512>}, {pipeline_mode = #tpu.pipeline_mode<synchronous>, transform_indices = @transform_4, window_bounds = array<i64: 3, 1, 512>}, {transform_indices = @transform_5, window_bounds = array<i64: 1, 8, 512>}]} {
    %c0 = arith.constant 0 : index
    %c0_0 = arith.constant 0 : index
    %c0_1 = arith.constant 0 : index
    %0 = vector.load %arg1[%c0, %c0_0, %c0_1] : memref<1x8x32xf32, #tpu.memory_space<vmem>>, vector<1x8x32xf32>
    %1 = vector.shape_cast %0 : vector<1x8x32xf32> to vector<8x32xf32>
    %c0_2 = arith.constant 0 : index
    %c0_3 = arith.constant 0 : index
    %c0_4 = arith.constant 0 : index
    %2 = vector.load %arg2[%c0_2, %c0_3, %c0_4] : memref<1x8x32xf32, #tpu.memory_space<vmem>>, vector<1x8x32xf32>
    %3 = vector.shape_cast %2 : vector<1x8x32xf32> to vector<8x32xf32>
    %c0_5 = arith.constant 0 : index
    %c0_6 = arith.constant 0 : index
    %c0_7 = arith.constant 0 : index
    %4 = vector.load %arg3[%c0_5, %c0_6, %c0_7] : memref<1x8x32xf32, #tpu.memory_space<vmem>>, vector<1x8x32xf32>
    %5 = vector.shape_cast %4 : vector<1x8x32xf32> to vector<8x32xf32>
    %c0_8 = arith.constant 0 : index
    %c0_9 = arith.constant 0 : index
    %c0_10 = arith.constant 0 : index
    %6 = vector.load %arg4[%c0_8, %c0_9, %c0_10] : memref<3x32x512xf32, #tpu.memory_space<vmem>>, vector<1x32x512xf32>
    %7 = vector.shape_cast %6 : vector<1x32x512xf32> to vector<32x512xf32>
    %cst = arith.constant dense<0.000000e+00> : vector<8x512xf32>
    %8 = tpu.matmul %1, %7, %cst {dimension_numbers = #tpu.dot_dimension_numbers<[1], [0], [0], [1], [0, 0, 1, 1], [], []>} : vector<8x32xf32>, vector<32x512xf32>, vector<8x512xf32> -> vector<8x512xf32>
    %c0_11 = arith.constant 0 : index
    %c0_12 = arith.constant 0 : index
    %c0_13 = arith.constant 0 : index
    %9 = vector.load %arg5[%c0_11, %c0_12, %c0_13] : memref<3x1x512xf32, #tpu.memory_space<vmem>>, vector<1x1x512xf32>
    %10 = vector.shape_cast %9 : vector<1x1x512xf32> to vector<1x512xf32>
    %11 = vector.broadcast %10 : vector<1x512xf32> to vector<8x512xf32>
    %12 = arith.addf %8, %11 : vector<8x512xf32>
    %c1 = arith.constant 1 : index
    %c0_14 = arith.constant 0 : index
    %c0_15 = arith.constant 0 : index
    %13 = vector.load %arg4[%c1, %c0_14, %c0_15] : memref<3x32x512xf32, #tpu.memory_space<vmem>>, vector<1x32x512xf32>
    %14 = vector.shape_cast %13 : vector<1x32x512xf32> to vector<32x512xf32>
    %cst_16 = arith.constant dense<0.000000e+00> : vector<8x512xf32>
    %15 = tpu.matmul %3, %14, %cst_16 {dimension_numbers = #tpu.dot_dimension_numbers<[1], [0], [0], [1], [0, 0, 1, 1], [], []>} : vector<8x32xf32>, vector<32x512xf32>, vector<8x512xf32> -> vector<8x512xf32>
    %c1_17 = arith.constant 1 : index
    %c0_18 = arith.constant 0 : index
    %c0_19 = arith.constant 0 : index
    %16 = vector.load %arg5[%c1_17, %c0_18, %c0_19] : memref<3x1x512xf32, #tpu.memory_space<vmem>>, vector<1x1x512xf32>
    %17 = vector.shape_cast %16 : vector<1x1x512xf32> to vector<1x512xf32>
    %18 = vector.broadcast %17 : vector<1x512xf32> to vector<8x512xf32>
    %19 = arith.addf %15, %18 : vector<8x512xf32>
    %c2 = arith.constant 2 : index
    %c0_20 = arith.constant 0 : index
    %c0_21 = arith.constant 0 : index
    %20 = vector.load %arg4[%c2, %c0_20, %c0_21] : memref<3x32x512xf32, #tpu.memory_space<vmem>>, vector<1x32x512xf32>
    %21 = vector.shape_cast %20 : vector<1x32x512xf32> to vector<32x512xf32>
    %cst_22 = arith.constant dense<0.000000e+00> : vector<8x512xf32>
    %22 = tpu.matmul %5, %21, %cst_22 {dimension_numbers = #tpu.dot_dimension_numbers<[1], [0], [0], [1], [0, 0, 1, 1], [], []>} : vector<8x32xf32>, vector<32x512xf32>, vector<8x512xf32> -> vector<8x512xf32>
    %c2_23 = arith.constant 2 : index
    %c0_24 = arith.constant 0 : index
    %c0_25 = arith.constant 0 : index
    %23 = vector.load %arg5[%c2_23, %c0_24, %c0_25] : memref<3x1x512xf32, #tpu.memory_space<vmem>>, vector<1x1x512xf32>
    %24 = vector.shape_cast %23 : vector<1x1x512xf32> to vector<1x512xf32>
    %25 = vector.broadcast %24 : vector<1x512xf32> to vector<8x512xf32>
    %26 = arith.addf %22, %25 : vector<8x512xf32>
    %27 = vector.shape_cast %12 : vector<8x512xf32> to vector<1x8x512xf32>
    %28 = vector.shape_cast %19 : vector<8x512xf32> to vector<1x8x512xf32>
    %29 = vector.shape_cast %26 : vector<8x512xf32> to vector<1x8x512xf32>
    %30 = vector.extract_strided_slice %27 {offsets = [0, 0, 0], sizes = [1, 8, 128], strides = [1, 1, 1]} : vector<1x8x512xf32> to vector<1x8x128xf32>
    %31 = vector.extract_strided_slice %28 {offsets = [0, 0, 0], sizes = [1, 8, 128], strides = [1, 1, 1]} : vector<1x8x512xf32> to vector<1x8x128xf32>
    %32 = vector.extract_strided_slice %29 {offsets = [0, 0, 0], sizes = [1, 8, 128], strides = [1, 1, 1]} : vector<1x8x512xf32> to vector<1x8x128xf32>
    "tpu.trace_start"() <{level = 10 : i32, message = "bqd,bkd->bqk"}> : () -> ()
    %cst_26 = arith.constant dense<0.000000e+00> : vector<1x8x8xf32>
    %33 = tpu.matmul %30, %31, %cst_26 {dimension_numbers = #tpu.dot_dimension_numbers<[2], [2], [1], [1], [0, 0, 0, 1, 1, 1], [0], [0]>} : vector<1x8x128xf32>, vector<1x8x128xf32>, vector<1x8x8xf32> -> vector<1x8x8xf32>
    "tpu.trace_stop"() : () -> ()
    %cst_27 = arith.constant dense<0xFF800000> : vector<1x8xf32>
    %34 = vector.multi_reduction <maximumf>, %33, %cst_27 [2] : vector<1x8x8xf32> to vector<1x8xf32>
    %35 = vector.shape_cast %34 : vector<1x8xf32> to vector<1x8x1xf32>
    %36 = vector.broadcast %35 : vector<1x8x1xf32> to vector<1x8x8xf32>
    %37 = arith.subf %33, %36 : vector<1x8x8xf32>
    %38 = math.exp %37 : vector<1x8x8xf32>
    %cst_28 = arith.constant dense<0.000000e+00> : vector<1x8xf32>
    %39 = vector.multi_reduction <add>, %38, %cst_28 [2] : vector<1x8x8xf32> to vector<1x8xf32>
    %40 = vector.shape_cast %39 : vector<1x8xf32> to vector<1x8x1xf32>
    %41 = tpu.reciprocal %40 : vector<1x8x1xf32> -> vector<1x8x1xf32>
    %42 = vector.broadcast %41 : vector<1x8x1xf32> to vector<1x8x8xf32>
    %43 = arith.mulf %38, %42 : vector<1x8x8xf32>
    "tpu.trace_start"() <{level = 10 : i32, message = "bqk,bkd->bqd"}> : () -> ()
    %cst_29 = arith.constant dense<0.000000e+00> : vector<1x8x128xf32>
    %44 = tpu.matmul %43, %32, %cst_29 {dimension_numbers = #tpu.dot_dimension_numbers<[2], [1], [1], [2], [0, 0, 0, 1, 1, 2], [0], [0]>} : vector<1x8x8xf32>, vector<1x8x128xf32>, vector<1x8x128xf32> -> vector<1x8x128xf32>
    "tpu.trace_stop"() : () -> ()
    %45 = vector.extract_strided_slice %27 {offsets = [0, 0, 128], sizes = [1, 8, 128], strides = [1, 1, 1]} : vector<1x8x512xf32> to vector<1x8x128xf32>
    %46 = vector.extract_strided_slice %28 {offsets = [0, 0, 128], sizes = [1, 8, 128], strides = [1, 1, 1]} : vector<1x8x512xf32> to vector<1x8x128xf32>
    %47 = vector.extract_strided_slice %29 {offsets = [0, 0, 128], sizes = [1, 8, 128], strides = [1, 1, 1]} : vector<1x8x512xf32> to vector<1x8x128xf32>
    "tpu.trace_start"() <{level = 10 : i32, message = "bqd,bkd->bqk"}> : () -> ()
    %cst_30 = arith.constant dense<0.000000e+00> : vector<1x8x8xf32>
    %48 = tpu.matmul %45, %46, %cst_30 {dimension_numbers = #tpu.dot_dimension_numbers<[2], [2], [1], [1], [0, 0, 0, 1, 1, 1], [0], [0]>} : vector<1x8x128xf32>, vector<1x8x128xf32>, vector<1x8x8xf32> -> vector<1x8x8xf32>
    "tpu.trace_stop"() : () -> ()
    %cst_31 = arith.constant dense<0xFF800000> : vector<1x8xf32>
    %49 = vector.multi_reduction <maximumf>, %48, %cst_31 [2] : vector<1x8x8xf32> to vector<1x8xf32>
    %50 = vector.shape_cast %49 : vector<1x8xf32> to vector<1x8x1xf32>
    %51 = vector.broadcast %50 : vector<1x8x1xf32> to vector<1x8x8xf32>
    %52 = arith.subf %48, %51 : vector<1x8x8xf32>
    %53 = math.exp %52 : vector<1x8x8xf32>
    %cst_32 = arith.constant dense<0.000000e+00> : vector<1x8xf32>
    %54 = vector.multi_reduction <add>, %53, %cst_32 [2] : vector<1x8x8xf32> to vector<1x8xf32>
    %55 = vector.shape_cast %54 : vector<1x8xf32> to vector<1x8x1xf32>
    %56 = tpu.reciprocal %55 : vector<1x8x1xf32> -> vector<1x8x1xf32>
    %57 = vector.broadcast %56 : vector<1x8x1xf32> to vector<1x8x8xf32>
    %58 = arith.mulf %53, %57 : vector<1x8x8xf32>
    "tpu.trace_start"() <{level = 10 : i32, message = "bqk,bkd->bqd"}> : () -> ()
    %cst_33 = arith.constant dense<0.000000e+00> : vector<1x8x128xf32>
    %59 = tpu.matmul %58, %47, %cst_33 {dimension_numbers = #tpu.dot_dimension_numbers<[2], [1], [1], [2], [0, 0, 0, 1, 1, 2], [0], [0]>} : vector<1x8x8xf32>, vector<1x8x128xf32>, vector<1x8x128xf32> -> vector<1x8x128xf32>
    "tpu.trace_stop"() : () -> ()
    %60 = vector.extract_strided_slice %27 {offsets = [0, 0, 256], sizes = [1, 8, 128], strides = [1, 1, 1]} : vector<1x8x512xf32> to vector<1x8x128xf32>
    %61 = vector.extract_strided_slice %28 {offsets = [0, 0, 256], sizes = [1, 8, 128], strides = [1, 1, 1]} : vector<1x8x512xf32> to vector<1x8x128xf32>
    %62 = vector.extract_strided_slice %29 {offsets = [0, 0, 256], sizes = [1, 8, 128], strides = [1, 1, 1]} : vector<1x8x512xf32> to vector<1x8x128xf32>
    "tpu.trace_start"() <{level = 10 : i32, message = "bqd,bkd->bqk"}> : () -> ()
    %cst_34 = arith.constant dense<0.000000e+00> : vector<1x8x8xf32>
    %63 = tpu.matmul %60, %61, %cst_34 {dimension_numbers = #tpu.dot_dimension_numbers<[2], [2], [1], [1], [0, 0, 0, 1, 1, 1], [0], [0]>} : vector<1x8x128xf32>, vector<1x8x128xf32>, vector<1x8x8xf32> -> vector<1x8x8xf32>
    "tpu.trace_stop"() : () -> ()
    %cst_35 = arith.constant dense<0xFF800000> : vector<1x8xf32>
    %64 = vector.multi_reduction <maximumf>, %63, %cst_35 [2] : vector<1x8x8xf32> to vector<1x8xf32>
    %65 = vector.shape_cast %64 : vector<1x8xf32> to vector<1x8x1xf32>
    %66 = vector.broadcast %65 : vector<1x8x1xf32> to vector<1x8x8xf32>
    %67 = arith.subf %63, %66 : vector<1x8x8xf32>
    %68 = math.exp %67 : vector<1x8x8xf32>
    %cst_36 = arith.constant dense<0.000000e+00> : vector<1x8xf32>
    %69 = vector.multi_reduction <add>, %68, %cst_36 [2] : vector<1x8x8xf32> to vector<1x8xf32>
    %70 = vector.shape_cast %69 : vector<1x8xf32> to vector<1x8x1xf32>
    %71 = tpu.reciprocal %70 : vector<1x8x1xf32> -> vector<1x8x1xf32>
    %72 = vector.broadcast %71 : vector<1x8x1xf32> to vector<1x8x8xf32>
    %73 = arith.mulf %68, %72 : vector<1x8x8xf32>
    "tpu.trace_start"() <{level = 10 : i32, message = "bqk,bkd->bqd"}> : () -> ()
    %cst_37 = arith.constant dense<0.000000e+00> : vector<1x8x128xf32>
    %74 = tpu.matmul %73, %62, %cst_37 {dimension_numbers = #tpu.dot_dimension_numbers<[2], [1], [1], [2], [0, 0, 0, 1, 1, 2], [0], [0]>} : vector<1x8x8xf32>, vector<1x8x128xf32>, vector<1x8x128xf32> -> vector<1x8x128xf32>
    "tpu.trace_stop"() : () -> ()
    %75 = vector.extract_strided_slice %27 {offsets = [0, 0, 384], sizes = [1, 8, 128], strides = [1, 1, 1]} : vector<1x8x512xf32> to vector<1x8x128xf32>
    %76 = vector.extract_strided_slice %28 {offsets = [0, 0, 384], sizes = [1, 8, 128], strides = [1, 1, 1]} : vector<1x8x512xf32> to vector<1x8x128xf32>
    %77 = vector.extract_strided_slice %29 {offsets = [0, 0, 384], sizes = [1, 8, 128], strides = [1, 1, 1]} : vector<1x8x512xf32> to vector<1x8x128xf32>
    "tpu.trace_start"() <{level = 10 : i32, message = "bqd,bkd->bqk"}> : () -> ()
    %cst_38 = arith.constant dense<0.000000e+00> : vector<1x8x8xf32>
    %78 = tpu.matmul %75, %76, %cst_38 {dimension_numbers = #tpu.dot_dimension_numbers<[2], [2], [1], [1], [0, 0, 0, 1, 1, 1], [0], [0]>} : vector<1x8x128xf32>, vector<1x8x128xf32>, vector<1x8x8xf32> -> vector<1x8x8xf32>
    "tpu.trace_stop"() : () -> ()
    %cst_39 = arith.constant dense<0xFF800000> : vector<1x8xf32>
    %79 = vector.multi_reduction <maximumf>, %78, %cst_39 [2] : vector<1x8x8xf32> to vector<1x8xf32>
    %80 = vector.shape_cast %79 : vector<1x8xf32> to vector<1x8x1xf32>
    %81 = vector.broadcast %80 : vector<1x8x1xf32> to vector<1x8x8xf32>
    %82 = arith.subf %78, %81 : vector<1x8x8xf32>
    %83 = math.exp %82 : vector<1x8x8xf32>
    %cst_40 = arith.constant dense<0.000000e+00> : vector<1x8xf32>
    %84 = vector.multi_reduction <add>, %83, %cst_40 [2] : vector<1x8x8xf32> to vector<1x8xf32>
    %85 = vector.shape_cast %84 : vector<1x8xf32> to vector<1x8x1xf32>
    %86 = tpu.reciprocal %85 : vector<1x8x1xf32> -> vector<1x8x1xf32>
    %87 = vector.broadcast %86 : vector<1x8x1xf32> to vector<1x8x8xf32>
    %88 = arith.mulf %83, %87 : vector<1x8x8xf32>
    "tpu.trace_start"() <{level = 10 : i32, message = "bqk,bkd->bqd"}> : () -> ()
    %cst_41 = arith.constant dense<0.000000e+00> : vector<1x8x128xf32>
    %89 = tpu.matmul %88, %77, %cst_41 {dimension_numbers = #tpu.dot_dimension_numbers<[2], [1], [1], [2], [0, 0, 0, 1, 1, 2], [0], [0]>} : vector<1x8x8xf32>, vector<1x8x128xf32>, vector<1x8x128xf32> -> vector<1x8x128xf32>
    "tpu.trace_stop"() : () -> ()
    %90 = tpu.concatenate %44, %59, %74, %89 in 2 : vector<1x8x128xf32>, vector<1x8x128xf32>, vector<1x8x128xf32>, vector<1x8x128xf32> -> vector<1x8x512xf32>
    %c0_42 = arith.constant 0 : index
    %c0_43 = arith.constant 0 : index
    %c0_44 = arith.constant 0 : index
    %91 = vector.load %arg6[%c0_42, %c0_43, %c0_44] : memref<1x8x512xf32, #tpu.memory_space<vmem>>, vector<1x8x512xf32>
    tpu.vector_store %arg6[%c0_42, %c0_43, %c0_44], %90 {strides = array<i32>} : memref<1x8x512xf32, #tpu.memory_space<vmem>>, vector<1x8x512xf32>,
    return
  }
  func.func @transform_0(%arg0: i32) -> (i32, i32, i32) {
    %c0_i32 = arith.constant 0 : i32
    %c0_i32_0 = arith.constant 0 : i32
    %c0_i32_1 = arith.constant 0 : i32
    return %arg0, %c0_i32, %c0_i32_0 : i32, i32, i32
  }
  func.func @transform_1(%arg0: i32) -> (i32, i32, i32) {
    %c0_i32 = arith.constant 0 : i32
    %c0_i32_0 = arith.constant 0 : i32
    %c0_i32_1 = arith.constant 0 : i32
    return %arg0, %c0_i32, %c0_i32_0 : i32, i32, i32
  }
  func.func @transform_2(%arg0: i32) -> (i32, i32, i32) {
    %c0_i32 = arith.constant 0 : i32
    %c0_i32_0 = arith.constant 0 : i32
    %c0_i32_1 = arith.constant 0 : i32
    return %arg0, %c0_i32, %c0_i32_0 : i32, i32, i32
  }
  func.func @transform_3(%arg0: i32) -> (i32, i32, i32) {
    %c0_i32 = arith.constant 0 : i32
    %c0_i32_0 = arith.constant 0 : i32
    %c0_i32_1 = arith.constant 0 : i32
    %c0_i32_2 = arith.constant 0 : i32
    return %c0_i32, %c0_i32_0, %c0_i32_1 : i32, i32, i32
  }
  func.func @transform_4(%arg0: i32) -> (i32, i32, i32) {
    %c0_i32 = arith.constant 0 : i32
    %c0_i32_0 = arith.constant 0 : i32
    %c0_i32_1 = arith.constant 0 : i32
    %c0_i32_2 = arith.constant 0 : i32
    return %c0_i32, %c0_i32_0, %c0_i32_1 : i32, i32, i32
  }
  func.func @transform_5(%arg0: i32) -> (i32, i32, i32) {
    %c0_i32 = arith.constant 0 : i32
    %c0_i32_0 = arith.constant 0 : i32
    %c0_i32_1 = arith.constant 0 : i32
    return %arg0, %c0_i32, %c0_i32_0 : i32, i32, i32
  }
}

</mosaic_0001>

<llo_original>
// kernel: tpu_custom_call.1
$region0: #{tpu_custom_call.1}
  #allocation0 [shape = 'u32[]', space=smem, size = 0x4, offset = 0x4, fixed_abs, tag = 'smem constant byte address 0x4 - core index']
  #allocation1 [shape = 'u32[144,128]{1,0:T(1,128)}', space=vmem, size = 0x12000, scoped, tag = 'internal scratch']
  %s0 = inlined_call_operand.hbm [shape: f32[2,8,32], index: 0, kind: input, shape index: {}]
  %s1 = inlined_call_operand.hbm [shape: f32[2,8,32], index: 1, kind: input, shape index: {}]
  %s2 = inlined_call_operand.hbm [shape: f32[2,8,32], index: 2, kind: input, shape index: {}]
  %s3 = inlined_call_operand.hbm [shape: f32[3,32,512], index: 3, kind: input, shape index: {}]
  %s4 = inlined_call_operand.vmem [shape: f32[3,1,512], index: 4, kind: input, shape index: {}]
  %s5 = inlined_call_operand.hbm [shape: f32[2,8,512], index: 5, kind: output, shape index: {}]
  %s6 = sld [smem:[#allocation0]]
  $region69: #{tpu_custom_call.1} parent=0
    _
  %s8 = ssub.s32 1, %s6
  %s9 = scalar_select 0, %s8, %s6
  $region1: #{tpu_custom_call.1} parent=0
    #allocation2 [shape = 'u8[8192]{0}', space=vmem, size = 0x2000, scoped, tag = 'input window, operand 0']
    #allocation3 [shape = 's32[2]{0}', space=sflag, size = 0x8, scoped, tag = 'scoped memory for tpu_custom_call.1']
    #allocation4 [shape = 's32[2]{0}', space=sflag, size = 0x8, scoped, tag = 'scoped memory for tpu_custom_call.1']
    #allocation5 [shape = 'u8[8192]{0}', space=vmem, size = 0x2000, scoped, tag = 'input window, operand 1']
    #allocation6 [shape = 's32[2]{0}', space=sflag, size = 0x8, scoped, tag = 'scoped memory for tpu_custom_call.1']
    #allocation7 [shape = 'u8[8192]{0}', space=vmem, size = 0x2000, scoped, tag = 'input window, operand 2']
    #allocation8 [shape = 'u8[196608]{0}', space=vmem, size = 0x30000, scoped, tag = 'input window, operand 3, single buffered']
    #allocation9 [shape = 's32[1]{0}', space=sflag, size = 0x4, scoped, tag = 'scoped memory for tpu_custom_call.1']
    #allocation10 [shape = 'u8[32768]{0}', space=vmem, size = 0x8000, scoped, tag = 'output window, operand 0']
    %10 = vsyncpa [#allocation3], 0
    %s11 = scalar_lea.sflag [#allocation3], 1
    %12 = vsyncpa %s11, 0
    %13 = vsyncpa [#allocation6], 0
    %s14 = scalar_lea.sflag [#allocation6], 1
    %15 = vsyncpa %s14, 0
    %16 = vsyncpa [#allocation9], 0
    %17 = vsyncpa [#allocation4], 0
    %s18 = scalar_lea.sflag [#allocation4], 1
    %19 = vsyncpa %s18, 0
    loop: start=0, step=1, limit=4
    $region2: #{tpu_custom_call.1} parent=1 // loop_pre_header
      _
    $region3: #{tpu_custom_call.1} parent=1 // loop_header
      %s21 = sphi 0, %s25
      %p22 = scmp.ge.s32.totalorder %s21, 4
      %s31 = sphi 0, %s33
      %s34 = sphi 0, %s31
      %s35 = sphi 0, %s34
      %s51 = sphi 0, %s35
      %s57 = sphi 0, %s59
      %s60 = sphi 0, %s57
      %s61 = sphi 0, %s60
      %s77 = sphi 0, %s61
      %s83 = sphi 0, %s85
      %s86 = sphi 0, %s83
      %s87 = sphi 0, %s86
      %s103 = sphi 0, %s87
      %s107 = sphi 0, %s107
      %s109 = sphi 0, %s107
      %s110 = sphi 0, %s109
      %s124 = sphi 0, %s110
      %s128 = sphi 0, %s128
      %s130 = sphi 0, %s128
      %s131 = sphi 0, %s130
      %s145 = sphi 0, %s131
      %s151 = sphi 0, %s153
      %s154 = sphi 0, %s151
      %s155 = sphi 0, %s154
      %s171 = sphi 0, %s155
    $region4: #{tpu_custom_call.1} parent=1 // loop_header_branch
      %24 = sbr.rel (%p22) target = $region8
    $region5: #{tpu_custom_call.1} parent=1 // loop_body
      %s26 = ssub.s32 %s21, 1
      %s27 = ssub.s32 %s21, 2
      %s28 = sadd.s32 %s21, 1
      %s29 = ssub.s32 %s21, %s28
      %p30 = scmp.eq.s32.totalorder %s29, 0
      %s32 = sadd.s32 %s31, 1
      %s33 = scalar_select %p30, %s31, %s32
      %p36 = pneg %p30
      %p37 = scmp.eq.s32.totalorder %s21, 1
      %p38 = por %p36, %p37
      %p39 = scmp.ne.s32.totalorder %s31, %s34
      %p40 = scmp.eq.s32.totalorder %s21, 0
      %p41 = por %p39, %p40
      %p42 = scmp.ne.s32.totalorder %s31, %s34
      %p43 = scmp.eq.s32.totalorder %s26, 1
      %p44 = por %p42, %p43
      %p45 = scmp.ne.s32.totalorder %s34, %s35
      %p46 = scmp.eq.s32.totalorder %s26, 0
      %p47 = por %p45, %p46
      %p48 = scmp.ne.s32.totalorder %s34, %s35
      %p49 = scmp.eq.s32.totalorder %s27, 1
      %p50 = por %p48, %p49
      %p52 = scmp.ne.s32.totalorder %s35, %s51
      %p53 = scmp.eq.s32.totalorder %s27, 0
      %p54 = por %p52, %p53
      %s55 = ssub.s32 %s21, %s28
      %p56 = scmp.eq.s32.totalorder %s55, 0
      %s58 = sadd.s32 %s57, 1
      %s59 = scalar_select %p56, %s57, %s58
      %p62 = pneg %p56
      %p63 = scmp.eq.s32.totalorder %s21, 1
      %p64 = por %p62, %p63
      %p65 = scmp.ne.s32.totalorder %s57, %s60
      %p66 = scmp.eq.s32.totalorder %s21, 0
      %p67 = por %p65, %p66
      %p68 = scmp.ne.s32.totalorder %s57, %s60
      %p69 = scmp.eq.s32.totalorder %s26, 1
      %p70 = por %p68, %p69
      %p71 = scmp.ne.s32.totalorder %s60, %s61
      %p72 = scmp.eq.s32.totalorder %s26, 0
      %p73 = por %p71, %p72
      %p74 = scmp.ne.s32.totalorder %s60, %s61
      %p75 = scmp.eq.s32.totalorder %s27, 1
      %p76 = por %p74, %p75
      %p78 = scmp.ne.s32.totalorder %s61, %s77
      %p79 = scmp.eq.s32.totalorder %s27, 0
      %p80 = por %p78, %p79
      %s81 = ssub.s32 %s21, %s28
      %p82 = scmp.eq.s32.totalorder %s81, 0
      %s84 = sadd.s32 %s83, 1
      %s85 = scalar_select %p82, %s83, %s84
      %p88 = pneg %p82
      %p89 = scmp.eq.s32.totalorder %s21, 1
      %p90 = por %p88, %p89
      %p91 = scmp.ne.s32.totalorder %s83, %s86
      %p92 = scmp.eq.s32.totalorder %s21, 0
      %p93 = por %p91, %p92
      %p94 = scmp.ne.s32.totalorder %s83, %s86
      %p95 = scmp.eq.s32.totalorder %s26, 1
      %p96 = por %p94, %p95
      %p97 = scmp.ne.s32.totalorder %s86, %s87
      %p98 = scmp.eq.s32.totalorder %s26, 0
      %p99 = por %p97, %p98
      %p100 = scmp.ne.s32.totalorder %s86, %s87
      %p101 = scmp.eq.s32.totalorder %s27, 1
      %p102 = por %p100, %p101
      %p104 = scmp.ne.s32.totalorder %s87, %s103
      %p105 = scmp.eq.s32.totalorder %s27, 0
      %p106 = por %p104, %p105
      %s108 = sadd.s32 %s107, 1
      %p111 = scmp.eq.s32.totalorder %s21, 1
      %p112 = scmp.ne.s32.totalorder %s107, %s109
      %p113 = scmp.eq.s32.totalorder %s21, 0
      %p114 = por %p112, %p113
      %p115 = scmp.ne.s32.totalorder %s107, %s109
      %p116 = scmp.eq.s32.totalorder %s26, 1
      %p117 = por %p115, %p116
      %p118 = scmp.ne.s32.totalorder %s109, %s110
      %p119 = scmp.eq.s32.totalorder %s26, 0
      %p120 = por %p118, %p119
      %p121 = scmp.ne.s32.totalorder %s109, %s110
      %p122 = scmp.eq.s32.totalorder %s27, 1
      %p123 = por %p121, %p122
      %p125 = scmp.ne.s32.totalorder %s110, %s124
      %p126 = scmp.eq.s32.totalorder %s27, 0
      %p127 = por %p125, %p126
      %s129 = sadd.s32 %s128, 1
      %p132 = scmp.eq.s32.totalorder %s21, 1
      %p133 = scmp.ne.s32.totalorder %s128, %s130
      %p134 = scmp.eq.s32.totalorder %s21, 0
      %p135 = por %p133, %p134
      %p136 = scmp.ne.s32.totalorder %s128, %s130
      %p137 = scmp.eq.s32.totalorder %s26, 1
      %p138 = por %p136, %p137
      %p139 = scmp.ne.s32.totalorder %s130, %s131
      %p140 = scmp.eq.s32.totalorder %s26, 0
      %p141 = por %p139, %p140
      %p142 = scmp.ne.s32.totalorder %s130, %s131
      %p143 = scmp.eq.s32.totalorder %s27, 1
      %p144 = por %p142, %p143
      %p146 = scmp.ne.s32.totalorder %s131, %s145
      %p147 = scmp.eq.s32.totalorder %s27, 0
      %p148 = por %p146, %p147
      %s149 = ssub.s32 %s21, %s28
      %p150 = scmp.eq.s32.totalorder %s149, 0
      %s152 = sadd.s32 %s151, 1
      %s153 = scalar_select %p150, %s151, %s152
      %p156 = pneg %p150
      %p157 = scmp.eq.s32.totalorder %s21, 1
      %p158 = por %p156, %p157
      %p159 = scmp.ne.s32.totalorder %s151, %s154
      %p160 = scmp.eq.s32.totalorder %s21, 0
      %p161 = por %p159, %p160
      %p162 = scmp.ne.s32.totalorder %s151, %s154
      %p163 = scmp.eq.s32.totalorder %s26, 1
      %p164 = por %p162, %p163
      %p165 = scmp.ne.s32.totalorder %s154, %s155
      %p166 = scmp.eq.s32.totalorder %s26, 0
      %p167 = por %p165, %p166
      %p168 = scmp.ne.s32.totalorder %s154, %s155
      %p169 = scmp.eq.s32.totalorder %s27, 1
      %p170 = por %p168, %p169
      %p172 = scmp.ne.s32.totalorder %s155, %s171
      %p173 = scmp.eq.s32.totalorder %s27, 0
      %p174 = por %p172, %p173
      %p175 = scmp.le.s32.totalorder 1, %s21
      %p176 = scmp.lt.s32.totalorder %s21, 3
      %p177 = pnand %p175, %p176
      %p178 = pneg %p177
      // Predicated region
      $region9: #{tpu_custom_call.1} parent=5 // pred_check
        _
      $region10: #{tpu_custom_call.1} parent=5 // pred_check_branch
        %180 = sbr.rel (%p177) target = $region12
      $region11: #{tpu_custom_call.1} parent=5 // pred_region
        %s181 = ssub.s32 %s21, 1
        // Predicated region
        $region13: #{tpu_custom_call.1} parent=11 // pred_check
          %p182 = pneg %p120
        $region14: #{tpu_custom_call.1} parent=11 // pred_check_branch
          %184 = sbr.rel (%p182) target = $region16
        $region15: #{tpu_custom_call.1} parent=11 // pred_region
          %s186 = ssub.s32 6144, 6144
          %187 = vsyncadd [#allocation9], %s186
          %s188 = sshll.u32 [#allocation8], 4
          %s189 = int_to_ptr.vmem [resolvable:$true] %s188
          %194 = dma.hbm_to_vmem [thread:$0]  %s3, 6144, %s189, [#allocation9], 512, 512, 32
        $region16: #{tpu_custom_call.1} parent=11 // pred_fallthru
          _
        // Predicated region
        $region17: #{tpu_custom_call.1} parent=11 // pred_check
          %p195 = pneg %p141
        $region18: #{tpu_custom_call.1} parent=11 // pred_check_branch
          %197 = sbr.rel (%p195) target = $region20
        $region19: #{tpu_custom_call.1} parent=11 // pred_region
          _
        $region20: #{tpu_custom_call.1} parent=11 // pred_fallthru
          _
      $region12: #{tpu_custom_call.1} parent=5 // pred_fallthru
        _
      %p198 = scmp.lt.s32.totalorder %s21, 2
      // Predicated region
      $region21: #{tpu_custom_call.1} parent=5 // pred_check
        %p199 = pneg %p198
      $region22: #{tpu_custom_call.1} parent=5 // pred_check_branch
        %201 = sbr.rel (%p199) target = $region24
      $region23: #{tpu_custom_call.1} parent=5 // pred_region
        // Predicated region
        $region25: #{tpu_custom_call.1} parent=23 // pred_check
          %p202 = pneg %p41
        $region26: #{tpu_custom_call.1} parent=23 // pred_check_branch
          %204 = sbr.rel (%p202) target = $region28
        $region27: #{tpu_custom_call.1} parent=23 // pred_region
          %s205 = sand.u32 %s31, 1
          %s206 = scalar_lea.sflag [#allocation3], %s205
          %s207 = sand.u32 %s31, 1
          %s208 = smul.addr %s207, 8
          %s209 = scalar_lea.vmem [#allocation2], %s208
          %s211 = ssub.s32 128, 128
          %212 = vsyncadd %s206, %s211
          %s213 = smul.addr %s21, 128
          %s214 = scalar_lea.hbm %s0, %s213
          %s216 = sshll.u32 %s209, 4
          %s217 = int_to_ptr.vmem [resolvable:$true] %s216
          %219 = dma.hbm_to_vmem [thread:$0]  %s214, 128, %s217, %s206
        $region28: #{tpu_custom_call.1} parent=23 // pred_fallthru
          _
        // Predicated region
        $region29: #{tpu_custom_call.1} parent=23 // pred_check
          %p220 = pneg %p67
        $region30: #{tpu_custom_call.1} parent=23 // pred_check_branch
          %222 = sbr.rel (%p220) target = $region32
        $region31: #{tpu_custom_call.1} parent=23 // pred_region
          %s223 = sand.u32 %s21, 1
          %s224 = scalar_lea.sflag [#allocation6], %s223
          %s225 = sand.u32 %s57, 1
          %s226 = smul.addr %s225, 8
          %s227 = scalar_lea.vmem [#allocation5], %s226
          %s229 = ssub.s32 128, 128
          %230 = vsyncadd %s224, %s229
          %s231 = smul.addr %s21, 128
          %s232 = scalar_lea.hbm %s1, %s231
          %s234 = sshll.u32 %s227, 4
          %s235 = int_to_ptr.vmem [resolvable:$true] %s234
          %237 = dma.hbm_to_vmem [thread:$0]  %s232, 128, %s235, %s224
        $region32: #{tpu_custom_call.1} parent=23 // pred_fallthru
          _
        // Predicated region
        $region33: #{tpu_custom_call.1} parent=23 // pred_check
          %p238 = pneg %p93
        $region34: #{tpu_custom_call.1} parent=23 // pred_check_branch
          %240 = sbr.rel (%p238) target = $region36
        $region35: #{tpu_custom_call.1} parent=23 // pred_region
          %s241 = sand.u32 %s21, 1
          %s242 = scalar_lea.sflag [#allocation6], %s241
          %s243 = sand.u32 %s83, 1
          %s244 = smul.addr %s243, 8
          %s245 = scalar_lea.vmem [#allocation7], %s244
          %s247 = ssub.s32 128, 128
          %248 = vsyncadd %s242, %s247
          %s249 = smul.addr %s21, 128
          %s250 = scalar_lea.hbm %s2, %s249
          %s252 = sshll.u32 %s245, 4
          %s253 = int_to_ptr.vmem [resolvable:$true] %s252
          %255 = dma.hbm_to_vmem [thread:$0]  %s250, 128, %s253, %s242
        $region36: #{tpu_custom_call.1} parent=23 // pred_fallthru
          _
      $region24: #{tpu_custom_call.1} parent=5 // pred_fallthru
        _
      %p256 = scmp.le.s32.totalorder 1, %s21
      %p257 = scmp.lt.s32.totalorder %s21, 3
      %p258 = pnand %p256, %p257
      %p259 = pneg %p258
      // Predicated region
      $region37: #{tpu_custom_call.1} parent=5 // pred_check
        _
      $region38: #{tpu_custom_call.1} parent=5 // pred_check_branch
        %261 = sbr.rel (%p258) target = $region40
      $region39: #{tpu_custom_call.1} parent=5 // pred_region
        %s262 = ssub.s32 %s21, 1
        %s263 = sand.u32 %s34, 1
        %s264 = scalar_lea.sflag [#allocation3], %s263
        %s265 = sand.u32 %s34, 1
        %s266 = smul.addr %s265, 8
        %s267 = scalar_lea.vmem [#allocation2], %s266
        // Predicated region
        $region41: #{tpu_custom_call.1} parent=39 // pred_check
          %p268 = pneg %p47
        $region42: #{tpu_custom_call.1} parent=39 // pred_check_branch
          %270 = sbr.rel (%p268) target = $region44
        $region43: #{tpu_custom_call.1} parent=39 // pred_region
          %271 = dma.done %s264, 128
        $region44: #{tpu_custom_call.1} parent=39 // pred_fallthru
          _
        %s272 = sand.u32 %s26, 1
        %s273 = scalar_lea.sflag [#allocation6], %s272
        %s274 = sand.u32 %s60, 1
        %s275 = smul.addr %s274, 8
        %s276 = scalar_lea.vmem [#allocation5], %s275
        // Predicated region
        $region45: #{tpu_custom_call.1} parent=39 // pred_check
          %p277 = pneg %p73
        $region46: #{tpu_custom_call.1} parent=39 // pred_check_branch
          %279 = sbr.rel (%p277) target = $region48
        $region47: #{tpu_custom_call.1} parent=39 // pred_region
          %280 = dma.done %s273, 128
        $region48: #{tpu_custom_call.1} parent=39 // pred_fallthru
          _
        %s281 = sand.u32 %s26, 1
        %s282 = scalar_lea.sflag [#allocation6], %s281
        %s283 = sand.u32 %s86, 1
        %s284 = smul.addr %s283, 8
        %s285 = scalar_lea.vmem [#allocation7], %s284
        // Predicated region
        $region49: #{tpu_custom_call.1} parent=39 // pred_check
          %p286 = pneg %p99
        $region50: #{tpu_custom_call.1} parent=39 // pred_check_branch
          %288 = sbr.rel (%p286) target = $region52
        $region51: #{tpu_custom_call.1} parent=39 // pred_region
          %289 = dma.done %s282, 128
        $region52: #{tpu_custom_call.1} parent=39 // pred_fallthru
          _
        // Predicated region
        $region53: #{tpu_custom_call.1} parent=39 // pred_check
          %p290 = pneg %p120
        $region54: #{tpu_custom_call.1} parent=39 // pred_check_branch
          %292 = sbr.rel (%p290) target = $region56
        $region55: #{tpu_custom_call.1} parent=39 // pred_region
          %293 = dma.done [#allocation9], 6144
        $region56: #{tpu_custom_call.1} parent=39 // pred_fallthru
          _
        %s294 = sand.u32 %s34, 1
        %s295 = scalar_lea.sflag [#allocation3], %s294
        %s296 = sand.u32 %s34, 1
        %s297 = smul.addr %s296, 8
        %s298 = scalar_lea.vmem [#allocation2], %s297
        %p299 = pneg %p47
        %p300 = pneg %p44
        %s301 = sand.u32 %s26, 1
        %s302 = scalar_lea.sflag [#allocation6], %s301
        %s303 = sand.u32 %s60, 1
        %s304 = smul.addr %s303, 8
        %s305 = scalar_lea.vmem [#allocation5], %s304
        %p306 = pneg %p73
        %p307 = pneg %p70
        %s308 = sand.u32 %s26, 1
        %s309 = scalar_lea.sflag [#allocation6], %s308
        %s310 = sand.u32 %s86, 1
        %s311 = smul.addr %s310, 8
        %s312 = scalar_lea.vmem [#allocation7], %s311
        %p313 = pneg %p99
        %p314 = pneg %p96
        %p315 = pneg %p120
        %p316 = pneg %p117
        %p317 = pneg %p141
        %p318 = pneg %p138
        %p319 = pneg %p167
        %p320 = pneg %p164
        %s321 = sand.u32 %s154, 1
        %s322 = scalar_lea.sflag [#allocation4], %s321
        %s323 = sand.u32 %s154, 1
        %s324 = smul.addr %s323, 32
        %s325 = scalar_lea.vmem [#allocation10], %s324
        %v326 = vld [vmem:[%s267] sm:$0xff]
        %v327 = vld [vmem:[%s276] sm:$0xff]
        %v328 = vld [vmem:[%s285] sm:$0xff]
        %v329 = vld [vmem:[#allocation8] sm:$0xff]
        %v330 = vld [vmem:[#allocation8 + $0x8] sm:$0xff]
        %v331 = vld [vmem:[#allocation8 + $0x10] sm:$0xff]
        %v332 = vld [vmem:[#allocation8 + $0x18] sm:$0xff]
        %v333 = vld [vmem:[#allocation8 + $0x20] sm:$0xff]
        %v334 = vld [vmem:[#allocation8 + $0x28] sm:$0xff]
        %v335 = vld [vmem:[#allocation8 + $0x30] sm:$0xff]
        %v336 = vld [vmem:[#allocation8 + $0x38] sm:$0xff]
        %v337 = vld [vmem:[#allocation8 + $0x40] sm:$0xff]
        %v338 = vld [vmem:[#allocation8 + $0x48] sm:$0xff]
        %v339 = vld [vmem:[#allocation8 + $0x50] sm:$0xff]
        %v340 = vld [vmem:[#allocation8 + $0x58] sm:$0xff]
        %v341 = vld [vmem:[#allocation8 + $0x60] sm:$0xff]
        %v342 = vld [vmem:[#allocation8 + $0x68] sm:$0xff]
        %v343 = vld [vmem:[#allocation8 + $0x70] sm:$0xff]
        %v344 = vld [vmem:[#allocation8 + $0x78] sm:$0xff]
        %v345 = vld [vmem:[%s4] sm:$0xf]
        %v347 = vlaneseq
        %v348 = vshrl.u32 %v347, 7
        %v349 = vsub.s32 0, %v348
        %v350 = vrot.slane %v345, %v349
        %v351 = vlaneseq
        %v352 = vshrl.u32 %v351, 7
        %v353 = vsub.s32 1, %v352
        %v354 = vrot.slane %v345, %v353
        %v355 = vlaneseq
        %v356 = vshrl.u32 %v355, 7
        %v357 = vsub.s32 2, %v356
        %v358 = vrot.slane %v345, %v357
        %v359 = vlaneseq
        %v360 = vshrl.u32 %v359, 7
        %v361 = vsub.s32 3, %v360
        %v362 = vrot.slane %v345, %v361
        %vm367 = vcmask 261120
        %v369 = vsel %vm367, %v326, 0
        %371 = vmatprep.subr.mxu0 %v330
        %372 = vmatpush1.msra.mxu0 %v329
        %373 = vmatprep.subr.mxu0 %v334
        %374 = vmatpush1.msra.mxu0 %v333
        %375 = vmatprep.subr.mxu0 %v338
        %376 = vmatpush1.msra.mxu0 %v337
        %377 = vmatprep.subr.mxu0 %v342
        %378 = vmatpush1.msra.mxu0 %v341
        %379 = vmatprep.subr.mxu0 0.0
        %380 = vmatpush1.msra.mxu0 0.0
        %381 = vmatprep.subr.mxu0 0.0
        %382 = vmatpush1.msra.mxu0 0.0
        %383 = vmatprep.subr.mxu0 0.0
        %384 = vmatpush1.msra.mxu0 0.0
        %385 = vmatprep.subr.mxu0 0.0
        %386 = vmatpush1.msra.mxu0 0.0
        %387 = vmatprep.subr.mxu0 0.0
        %388 = vmatpush1.msra.mxu0 0.0
        %389 = vmatprep.subr.mxu0 0.0
        %390 = vmatpush1.msra.mxu0 0.0
        %391 = vmatprep.subr.mxu0 0.0
        %392 = vmatpush1.msra.mxu0 0.0
        %393 = vmatprep.subr.mxu0 0.0
        %394 = vmatpush1.msra.mxu0 0.0
        %395 = vmatprep.subr.mxu0 0.0
        %396 = vmatpush1.msra.mxu0 0.0
        %397 = vmatprep.subr.mxu0 0.0
        %398 = vmatpush1.msra.mxu0 0.0
        %399 = vmatprep.subr.mxu0 0.0
        %400 = vmatpush1.msra.mxu0 0.0
        %401 = vmatprep.subr.mxu0 0.0
        %402 = vmatpush1.msra.mxu0 0.0
        %403 = vmatprep.subr.mxu0 0.0
        %404 = vmatpush1.msra.mxu0 0.0
        %405 = vmatprep.subr.mxu0 0.0
        %406 = vmatpush1.msra.mxu0 0.0
        %407 = vmatprep.subr.mxu0 0.0
        %408 = vmatpush1.msra.mxu0 0.0
        %409 = vmatprep.subr.mxu0 0.0
        %410 = vmatpush1.msra.mxu0 0.0
        %411 = vmatprep.subr.mxu0 0.0
        %412 = vmatpush1.msra.mxu0 0.0
        %413 = vmatprep.subr.mxu0 0.0
        %414 = vmatpush1.msra.mxu0 0.0
        %415 = vmatprep.subr.mxu0 0.0
        %416 = vmatpush1.msra.mxu0 0.0
        %417 = vmatprep.subr.mxu0 0.0
        %418 = vmatpush1.msra.mxu0 0.0
        %419 = vmatprep.subr.mxu0 0.0
        %420 = vmatpush1.msra.mxu0 0.0
        %421 = vmatprep.subr.mxu0 0.0
        %422 = vmatpush1.msra.mxu0 0.0
        %423 = vmatprep.subr.mxu0 0.0
        %424 = vmatpush1.msra.mxu0 0.0
        %425 = vmatprep.subr.mxu0 0.0
        %426 = vmatpush1.msra.mxu0 0.0
        %427 = vmatprep.subr.mxu0 0.0
        %428 = vmatpush1.msra.mxu0 0.0
        %429 = vmatprep.subr.mxu0 0.0
        %430 = vmatpush1.msra.mxu0 0.0
        %431 = vmatprep.subr.mxu0 0.0
        %432 = vmatpush1.msra.mxu0 0.0
        %433 = vmatprep.subr.mxu0 0.0
        %434 = vmatpush1.msra.mxu0 0.0
        %435 = vmatprep.mubr.f32.mxu0 0.0
        %436 = vmatmul.mubr.f32.gmra.mrb[0].mxu0 %v369
        %v437 = vpop.f32.mrb[0].mxu0
        %v438 = vadd.f32 %v350, %v437
        %v439 = vpop.f32.mrb[0].mxu0
        %v440 = vadd.f32 %v354, %v439
        %441 = vdwg.mxu0
        %442 = vmatprep.subr.mxu0 %v332
        %443 = vmatpush1.msra.mxu0 %v331
        %444 = vmatprep.subr.mxu0 %v336
        %445 = vmatpush1.msra.mxu0 %v335
        %446 = vmatprep.subr.mxu0 %v340
        %447 = vmatpush1.msra.mxu0 %v339
        %448 = vmatprep.subr.mxu0 %v344
        %449 = vmatpush1.msra.mxu0 %v343
        %450 = vmatprep.subr.mxu0 0.0
        %451 = vmatpush1.msra.mxu0 0.0
        %452 = vmatprep.subr.mxu0 0.0
        %453 = vmatpush1.msra.mxu0 0.0
        %454 = vmatprep.subr.mxu0 0.0
        %455 = vmatpush1.msra.mxu0 0.0
        %456 = vmatprep.subr.mxu0 0.0
        %457 = vmatpush1.msra.mxu0 0.0
        %458 = vmatprep.subr.mxu0 0.0
        %459 = vmatpush1.msra.mxu0 0.0
        %460 = vmatprep.subr.mxu0 0.0
        %461 = vmatpush1.msra.mxu0 0.0
        %462 = vmatprep.subr.mxu0 0.0
        %463 = vmatpush1.msra.mxu0 0.0
        %464 = vmatprep.subr.mxu0 0.0
        %465 = vmatpush1.msra.mxu0 0.0
        %466 = vmatprep.subr.mxu0 0.0
        %467 = vmatpush1.msra.mxu0 0.0
        %468 = vmatprep.subr.mxu0 0.0
        %469 = vmatpush1.msra.mxu0 0.0
        %470 = vmatprep.subr.mxu0 0.0
        %471 = vmatpush1.msra.mxu0 0.0
        %472 = vmatprep.subr.mxu0 0.0
        %473 = vmatpush1.msra.mxu0 0.0
        %474 = vmatprep.subr.mxu0 0.0
        %475 = vmatpush1.msra.mxu0 0.0
        %476 = vmatprep.subr.mxu0 0.0
        %477 = vmatpush1.msra.mxu0 0.0
        %478 = vmatprep.subr.mxu0 0.0
        %479 = vmatpush1.msra.mxu0 0.0
        %480 = vmatprep.subr.mxu0 0.0
        %481 = vmatpush1.msra.mxu0 0.0
        %482 = vmatprep.subr.mxu0 0.0
        %483 = vmatpush1.msra.mxu0 0.0
        %484 = vmatprep.subr.mxu0 0.0
        %485 = vmatpush1.msra.mxu0 0.0
        %486 = vmatprep.subr.mxu0 0.0
        %487 = vmatpush1.msra.mxu0 0.0
        %488 = vmatprep.subr.mxu0 0.0
        %489 = vmatpush1.msra.mxu0 0.0
        %490 = vmatprep.subr.mxu0 0.0
        %491 = vmatpush1.msra.mxu0 0.0
        %492 = vmatprep.subr.mxu0 0.0
        %493 = vmatpush1.msra.mxu0 0.0
        %494 = vmatprep.subr.mxu0 0.0
        %495 = vmatpush1.msra.mxu0 0.0
        %496 = vmatprep.subr.mxu0 0.0
        %497 = vmatpush1.msra.mxu0 0.0
        %498 = vmatprep.subr.mxu0 0.0
        %499 = vmatpush1.msra.mxu0 0.0
        %500 = vmatprep.subr.mxu0 0.0
        %501 = vmatpush1.msra.mxu0 0.0
        %502 = vmatprep.subr.mxu0 0.0
        %503 = vmatpush1.msra.mxu0 0.0
        %504 = vmatprep.subr.mxu0 0.0
        %505 = vmatpush1.msra.mxu0 0.0
        %506 = vmatprep.mubr.f32.mxu0 0.0
        %507 = vmatmul.mubr.f32.gmra.mrb[0].mxu0 %v369
        %v508 = vpop.f32.mrb[0].mxu0
        %v509 = vadd.f32 %v358, %v508
        %v510 = vpop.f32.mrb[0].mxu0
        %v511 = vadd.f32 %v362, %v510
        %512 = vdwg.mxu0
        %s513 = scalar_lea.vmem [#allocation8], 128
        %v514 = vld [vmem:[%s513] sm:$0xff]
        %v515 = vld [vmem:[%s513 + $0x8] sm:$0xff]
        %v516 = vld [vmem:[%s513 + $0x10] sm:$0xff]
        %v517 = vld [vmem:[%s513 + $0x18] sm:$0xff]
        %v518 = vld [vmem:[%s513 + $0x20] sm:$0xff]
        %v519 = vld [vmem:[%s513 + $0x28] sm:$0xff]
        %v520 = vld [vmem:[%s513 + $0x30] sm:$0xff]
        %v521 = vld [vmem:[%s513 + $0x38] sm:$0xff]
        %v522 = vld [vmem:[%s513 + $0x40] sm:$0xff]
        %v523 = vld [vmem:[%s513 + $0x48] sm:$0xff]
        %v524 = vld [vmem:[%s513 + $0x50] sm:$0xff]
        %v525 = vld [vmem:[%s513 + $0x58] sm:$0xff]
        %v526 = vld [vmem:[%s513 + $0x60] sm:$0xff]
        %v527 = vld [vmem:[%s513 + $0x68] sm:$0xff]
        %v528 = vld [vmem:[%s513 + $0x70] sm:$0xff]
        %v529 = vld [vmem:[%s513 + $0x78] sm:$0xff]
        %s530 = scalar_lea.vmem %s4, 4
        %v531 = vld [vmem:[%s530] sm:$0xf]
        %v533 = vlaneseq
        %v534 = vshrl.u32 %v533, 7
        %v535 = vsub.s32 0, %v534
        %v536 = vrot.slane %v531, %v535
        %v537 = vlaneseq
        %v538 = vshrl.u32 %v537, 7
        %v539 = vsub.s32 1, %v538
        %v540 = vrot.slane %v531, %v539
        %v541 = vlaneseq
        %v542 = vshrl.u32 %v541, 7
        %v543 = vsub.s32 2, %v542
        %v544 = vrot.slane %v531, %v543
        %v545 = vlaneseq
        %v546 = vshrl.u32 %v545, 7
        %v547 = vsub.s32 3, %v546
        %v548 = vrot.slane %v531, %v547
        %v554 = vsel %vm367, %v327, 0
        %556 = vmatprep.subr.mxu0 %v515
        %557 = vmatpush1.msra.mxu0 %v514
        %558 = vmatprep.subr.mxu0 %v519
        %559 = vmatpush1.msra.mxu0 %v518
        %560 = vmatprep.subr.mxu0 %v523
        %561 = vmatpush1.msra.mxu0 %v522
        %562 = vmatprep.subr.mxu0 %v527
        %563 = vmatpush1.msra.mxu0 %v526
        %564 = vmatprep.subr.mxu0 0.0
        %565 = vmatpush1.msra.mxu0 0.0
        %566 = vmatprep.subr.mxu0 0.0
        %567 = vmatpush1.msra.mxu0 0.0
        %568 = vmatprep.subr.mxu0 0.0
        %569 = vmatpush1.msra.mxu0 0.0
        %570 = vmatprep.subr.mxu0 0.0
        %571 = vmatpush1.msra.mxu0 0.0
        %572 = vmatprep.subr.mxu0 0.0
        %573 = vmatpush1.msra.mxu0 0.0
        %574 = vmatprep.subr.mxu0 0.0
        %575 = vmatpush1.msra.mxu0 0.0
        %576 = vmatprep.subr.mxu0 0.0
        %577 = vmatpush1.msra.mxu0 0.0
        %578 = vmatprep.subr.mxu0 0.0
        %579 = vmatpush1.msra.mxu0 0.0
        %580 = vmatprep.subr.mxu0 0.0
        %581 = vmatpush1.msra.mxu0 0.0
        %582 = vmatprep.subr.mxu0 0.0
        %583 = vmatpush1.msra.mxu0 0.0
        %584 = vmatprep.subr.mxu0 0.0
        %585 = vmatpush1.msra.mxu0 0.0
        %586 = vmatprep.subr.mxu0 0.0
        %587 = vmatpush1.msra.mxu0 0.0
        %588 = vmatprep.subr.mxu0 0.0
        %589 = vmatpush1.msra.mxu0 0.0
        %590 = vmatprep.subr.mxu0 0.0
        %591 = vmatpush1.msra.mxu0 0.0
        %592 = vmatprep.subr.mxu0 0.0
        %593 = vmatpush1.msra.mxu0 0.0
        %594 = vmatprep.subr.mxu0 0.0
        %595 = vmatpush1.msra.mxu0 0.0
        %596 = vmatprep.subr.mxu0 0.0
        %597 = vmatpush1.msra.mxu0 0.0
        %598 = vmatprep.subr.mxu0 0.0
        %599 = vmatpush1.msra.mxu0 0.0
        %600 = vmatprep.subr.mxu0 0.0
        %601 = vmatpush1.msra.mxu0 0.0
        %602 = vmatprep.subr.mxu0 0.0
        %603 = vmatpush1.msra.mxu0 0.0
        %604 = vmatprep.subr.mxu0 0.0
        %605 = vmatpush1.msra.mxu0 0.0
        %606 = vmatprep.subr.mxu0 0.0
        %607 = vmatpush1.msra.mxu0 0.0
        %608 = vmatprep.subr.mxu0 0.0
        %609 = vmatpush1.msra.mxu0 0.0
        %610 = vmatprep.subr.mxu0 0.0
        %611 = vmatpush1.msra.mxu0 0.0
        %612 = vmatprep.subr.mxu0 0.0
        %613 = vmatpush1.msra.mxu0 0.0
        %614 = vmatprep.subr.mxu0 0.0
        %615 = vmatpush1.msra.mxu0 0.0
        %616 = vmatprep.subr.mxu0 0.0
        %617 = vmatpush1.msra.mxu0 0.0
        %618 = vmatprep.subr.mxu0 0.0
        %619 = vmatpush1.msra.mxu0 0.0
        %620 = vmatprep.mubr.f32.mxu0 0.0
        %621 = vmatmul.mubr.f32.gmra.mrb[0].mxu0 %v554
        %v622 = vpop.f32.mrb[0].mxu0
        %v623 = vadd.f32 %v536, %v622
        %v624 = vpop.f32.mrb[0].mxu0
        %v625 = vadd.f32 %v540, %v624
        %626 = vdwg.mxu0
        %627 = vmatprep.subr.mxu0 %v517
        %628 = vmatpush1.msra.mxu0 %v516
        %629 = vmatprep.subr.mxu0 %v521
        %630 = vmatpush1.msra.mxu0 %v520
        %631 = vmatprep.subr.mxu0 %v525
        %632 = vmatpush1.msra.mxu0 %v524
        %633 = vmatprep.subr.mxu0 %v529
        %634 = vmatpush1.msra.mxu0 %v528
        %635 = vmatprep.subr.mxu0 0.0
        %636 = vmatpush1.msra.mxu0 0.0
        %637 = vmatprep.subr.mxu0 0.0
        %638 = vmatpush1.msra.mxu0 0.0
        %639 = vmatprep.subr.mxu0 0.0
        %640 = vmatpush1.msra.mxu0 0.0
        %641 = vmatprep.subr.mxu0 0.0
        %642 = vmatpush1.msra.mxu0 0.0
        %643 = vmatprep.subr.mxu0 0.0
        %644 = vmatpush1.msra.mxu0 0.0
        %645 = vmatprep.subr.mxu0 0.0
        %646 = vmatpush1.msra.mxu0 0.0
        %647 = vmatprep.subr.mxu0 0.0
        %648 = vmatpush1.msra.mxu0 0.0
        %649 = vmatprep.subr.mxu0 0.0
        %650 = vmatpush1.msra.mxu0 0.0
        %651 = vmatprep.subr.mxu0 0.0
        %652 = vmatpush1.msra.mxu0 0.0
        %653 = vmatprep.subr.mxu0 0.0
        %654 = vmatpush1.msra.mxu0 0.0
        %655 = vmatprep.subr.mxu0 0.0
        %656 = vmatpush1.msra.mxu0 0.0
        %657 = vmatprep.subr.mxu0 0.0
        %658 = vmatpush1.msra.mxu0 0.0
        %659 = vmatprep.subr.mxu0 0.0
        %660 = vmatpush1.msra.mxu0 0.0
        %661 = vmatprep.subr.mxu0 0.0
        %662 = vmatpush1.msra.mxu0 0.0
        %663 = vmatprep.subr.mxu0 0.0
        %664 = vmatpush1.msra.mxu0 0.0
        %665 = vmatprep.subr.mxu0 0.0
        %666 = vmatpush1.msra.mxu0 0.0
        %667 = vmatprep.subr.mxu0 0.0
        %668 = vmatpush1.msra.mxu0 0.0
        %669 = vmatprep.subr.mxu0 0.0
        %670 = vmatpush1.msra.mxu0 0.0
        %671 = vmatprep.subr.mxu0 0.0
        %672 = vmatpush1.msra.mxu0 0.0
        %673 = vmatprep.subr.mxu0 0.0
        %674 = vmatpush1.msra.mxu0 0.0
        %675 = vmatprep.subr.mxu0 0.0
        %676 = vmatpush1.msra.mxu0 0.0
        %677 = vmatprep.subr.mxu0 0.0
        %678 = vmatpush1.msra.mxu0 0.0
        %679 = vmatprep.subr.mxu0 0.0
        %680 = vmatpush1.msra.mxu0 0.0
        %681 = vmatprep.subr.mxu0 0.0
        %682 = vmatpush1.msra.mxu0 0.0
        %683 = vmatprep.subr.mxu0 0.0
        %684 = vmatpush1.msra.mxu0 0.0
        %685 = vmatprep.subr.mxu0 0.0
        %686 = vmatpush1.msra.mxu0 0.0
        %687 = vmatprep.subr.mxu0 0.0
        %688 = vmatpush1.msra.mxu0 0.0
        %689 = vmatprep.subr.mxu0 0.0
        %690 = vmatpush1.msra.mxu0 0.0
        %691 = vmatprep.mubr.f32.mxu0 0.0
        %692 = vmatmul.mubr.f32.gmra.mrb[0].mxu0 %v554
        %v693 = vpop.f32.mrb[0].mxu0
        %v694 = vadd.f32 %v544, %v693
        %v695 = vpop.f32.mrb[0].mxu0
        %v696 = vadd.f32 %v548, %v695
        %697 = vdwg.mxu0
        %s698 = scalar_lea.vmem [#allocation8], 256
        %v699 = vld [vmem:[%s698] sm:$0xff]
        %v700 = vld [vmem:[%s698 + $0x8] sm:$0xff]
        %v701 = vld [vmem:[%s698 + $0x10] sm:$0xff]
        %v702 = vld [vmem:[%s698 + $0x18] sm:$0xff]
        %v703 = vld [vmem:[%s698 + $0x20] sm:$0xff]
        %v704 = vld [vmem:[%s698 + $0x28] sm:$0xff]
        %v705 = vld [vmem:[%s698 + $0x30] sm:$0xff]
        %v706 = vld [vmem:[%s698 + $0x38] sm:$0xff]
        %v707 = vld [vmem:[%s698 + $0x40] sm:$0xff]
        %v708 = vld [vmem:[%s698 + $0x48] sm:$0xff]
        %v709 = vld [vmem:[%s698 + $0x50] sm:$0xff]
        %v710 = vld [vmem:[%s698 + $0x58] sm:$0xff]
        %v711 = vld [vmem:[%s698 + $0x60] sm:$0xff]
        %v712 = vld [vmem:[%s698 + $0x68] sm:$0xff]
        %v713 = vld [vmem:[%s698 + $0x70] sm:$0xff]
        %v714 = vld [vmem:[%s698 + $0x78] sm:$0xff]
        %s715 = scalar_lea.vmem %s4, 8
        %v716 = vld [vmem:[%s715] sm:$0xf]
        %v718 = vlaneseq
        %v719 = vshrl.u32 %v718, 7
        %v720 = vsub.s32 0, %v719
        %v721 = vrot.slane %v716, %v720
        %v722 = vlaneseq
        %v723 = vshrl.u32 %v722, 7
        %v724 = vsub.s32 1, %v723
        %v725 = vrot.slane %v716, %v724
        %v726 = vlaneseq
        %v727 = vshrl.u32 %v726, 7
        %v728 = vsub.s32 2, %v727
        %v729 = vrot.slane %v716, %v728
        %v730 = vlaneseq
        %v731 = vshrl.u32 %v730, 7
        %v732 = vsub.s32 3, %v731
        %v733 = vrot.slane %v716, %v732
        %v739 = vsel %vm367, %v328, 0
        %741 = vmatprep.subr.mxu0 %v700
        %742 = vmatpush1.msra.mxu0 %v699
        %743 = vmatprep.subr.mxu0 %v704
        %744 = vmatpush1.msra.mxu0 %v703
        %745 = vmatprep.subr.mxu0 %v708
        %746 = vmatpush1.msra.mxu0 %v707
        %747 = vmatprep.subr.mxu0 %v712
        %748 = vmatpush1.msra.mxu0 %v711
        %749 = vmatprep.subr.mxu0 0.0
        %750 = vmatpush1.msra.mxu0 0.0
        %751 = vmatprep.subr.mxu0 0.0
        %752 = vmatpush1.msra.mxu0 0.0
        %753 = vmatprep.subr.mxu0 0.0
        %754 = vmatpush1.msra.mxu0 0.0
        %755 = vmatprep.subr.mxu0 0.0
        %756 = vmatpush1.msra.mxu0 0.0
        %757 = vmatprep.subr.mxu0 0.0
        %758 = vmatpush1.msra.mxu0 0.0
        %759 = vmatprep.subr.mxu0 0.0
        %760 = vmatpush1.msra.mxu0 0.0
        %761 = vmatprep.subr.mxu0 0.0
        %762 = vmatpush1.msra.mxu0 0.0
        %763 = vmatprep.subr.mxu0 0.0
        %764 = vmatpush1.msra.mxu0 0.0
        %765 = vmatprep.subr.mxu0 0.0
        %766 = vmatpush1.msra.mxu0 0.0
        %767 = vmatprep.subr.mxu0 0.0
        %768 = vmatpush1.msra.mxu0 0.0
        %769 = vmatprep.subr.mxu0 0.0
        %770 = vmatpush1.msra.mxu0 0.0
        %771 = vmatprep.subr.mxu0 0.0
        %772 = vmatpush1.msra.mxu0 0.0
        %773 = vmatprep.subr.mxu0 0.0
        %774 = vmatpush1.msra.mxu0 0.0
        %775 = vmatprep.subr.mxu0 0.0
        %776 = vmatpush1.msra.mxu0 0.0
        %777 = vmatprep.subr.mxu0 0.0
        %778 = vmatpush1.msra.mxu0 0.0
        %779 = vmatprep.subr.mxu0 0.0
        %780 = vmatpush1.msra.mxu0 0.0
        %781 = vmatprep.subr.mxu0 0.0
        %782 = vmatpush1.msra.mxu0 0.0
        %783 = vmatprep.subr.mxu0 0.0
        %784 = vmatpush1.msra.mxu0 0.0
        %785 = vmatprep.subr.mxu0 0.0
        %786 = vmatpush1.msra.mxu0 0.0
        %787 = vmatprep.subr.mxu0 0.0
        %788 = vmatpush1.msra.mxu0 0.0
        %789 = vmatprep.subr.mxu0 0.0
        %790 = vmatpush1.msra.mxu0 0.0
        %791 = vmatprep.subr.mxu0 0.0
        %792 = vmatpush1.msra.mxu0 0.0
        %793 = vmatprep.subr.mxu0 0.0
        %794 = vmatpush1.msra.mxu0 0.0
        %795 = vmatprep.subr.mxu0 0.0
        %796 = vmatpush1.msra.mxu0 0.0
        %797 = vmatprep.subr.mxu0 0.0
        %798 = vmatpush1.msra.mxu0 0.0
        %799 = vmatprep.subr.mxu0 0.0
        %800 = vmatpush1.msra.mxu0 0.0
        %801 = vmatprep.subr.mxu0 0.0
        %802 = vmatpush1.msra.mxu0 0.0
        %803 = vmatprep.subr.mxu0 0.0
        %804 = vmatpush1.msra.mxu0 0.0
        %805 = vmatprep.mubr.f32.mxu0 0.0
        %806 = vmatmul.mubr.f32.gmra.mrb[0].mxu0 %v739
        %v807 = vpop.f32.mrb[0].mxu0
        %v808 = vadd.f32 %v721, %v807
        %v809 = vpop.f32.mrb[0].mxu0
        %v810 = vadd.f32 %v725, %v809
        %811 = vdwg.mxu0
        %812 = vmatprep.subr.mxu0 %v702
        %813 = vmatpush1.msra.mxu0 %v701
        %814 = vmatprep.subr.mxu0 %v706
        %815 = vmatpush1.msra.mxu0 %v705
        %816 = vmatprep.subr.mxu0 %v710
        %817 = vmatpush1.msra.mxu0 %v709
        %818 = vmatprep.subr.mxu0 %v714
        %819 = vmatpush1.msra.mxu0 %v713
        %820 = vmatprep.subr.mxu0 0.0
        %821 = vmatpush1.msra.mxu0 0.0
        %822 = vmatprep.subr.mxu0 0.0
        %823 = vmatpush1.msra.mxu0 0.0
        %824 = vmatprep.subr.mxu0 0.0
        %825 = vmatpush1.msra.mxu0 0.0
        %826 = vmatprep.subr.mxu0 0.0
        %827 = vmatpush1.msra.mxu0 0.0
        %828 = vmatprep.subr.mxu0 0.0
        %829 = vmatpush1.msra.mxu0 0.0
        %830 = vmatprep.subr.mxu0 0.0
        %831 = vmatpush1.msra.mxu0 0.0
        %832 = vmatprep.subr.mxu0 0.0
        %833 = vmatpush1.msra.mxu0 0.0
        %834 = vmatprep.subr.mxu0 0.0
        %835 = vmatpush1.msra.mxu0 0.0
        %836 = vmatprep.subr.mxu0 0.0
        %837 = vmatpush1.msra.mxu0 0.0
        %838 = vmatprep.subr.mxu0 0.0
        %839 = vmatpush1.msra.mxu0 0.0
        %840 = vmatprep.subr.mxu0 0.0
        %841 = vmatpush1.msra.mxu0 0.0
        %842 = vmatprep.subr.mxu0 0.0
        %843 = vmatpush1.msra.mxu0 0.0
        %844 = vmatprep.subr.mxu0 0.0
        %845 = vmatpush1.msra.mxu0 0.0
        %846 = vmatprep.subr.mxu0 0.0
        %847 = vmatpush1.msra.mxu0 0.0
        %848 = vmatprep.subr.mxu0 0.0
        %849 = vmatpush1.msra.mxu0 0.0
        %850 = vmatprep.subr.mxu0 0.0
        %851 = vmatpush1.msra.mxu0 0.0
        %852 = vmatprep.subr.mxu0 0.0
        %853 = vmatpush1.msra.mxu0 0.0
        %854 = vmatprep.subr.mxu0 0.0
        %855 = vmatpush1.msra.mxu0 0.0
        %856 = vmatprep.subr.mxu0 0.0
        %857 = vmatpush1.msra.mxu0 0.0
        %858 = vmatprep.subr.mxu0 0.0
        %859 = vmatpush1.msra.mxu0 0.0
        %860 = vmatprep.subr.mxu0 0.0
        %861 = vmatpush1.msra.mxu0 0.0
        %862 = vmatprep.subr.mxu0 0.0
        %863 = vmatpush1.msra.mxu0 0.0
        %864 = vmatprep.subr.mxu0 0.0
        %865 = vmatpush1.msra.mxu0 0.0
        %866 = vmatprep.subr.mxu0 0.0
        %867 = vmatpush1.msra.mxu0 0.0
        %868 = vmatprep.subr.mxu0 0.0
        %869 = vmatpush1.msra.mxu0 0.0
        %870 = vmatprep.subr.mxu0 0.0
        %871 = vmatpush1.msra.mxu0 0.0
        %872 = vmatprep.subr.mxu0 0.0
        %873 = vmatpush1.msra.mxu0 0.0
        %874 = vmatprep.subr.mxu0 0.0
        %875 = vmatpush1.msra.mxu0 0.0
        %876 = vmatprep.mubr.f32.mxu0 0.0
        %877 = vmatmul.mubr.f32.gmra.mrb[0].mxu0 %v739
        %v878 = vpop.f32.mrb[0].mxu0
        %v879 = vadd.f32 %v729, %v878
        %v880 = vpop.f32.mrb[0].mxu0
        %v881 = vadd.f32 %v733, %v880
        %882 = vdwg.mxu0
        %883 = vmatprep.subr.mxu0 0.0
        %884 = vmatpush1.xpose.msra.mxu0 %v623
        %885 = vmatprep.subr.mxu0 0.0
        %886 = vmatpush1.xpose.msra.mxu0 0.0
        %887 = vmatprep.subr.mxu0 0.0
        %888 = vmatpush1.xpose.msra.mxu0 0.0
        %889 = vmatprep.subr.mxu0 0.0
        %890 = vmatpush1.xpose.msra.mxu0 0.0
        %891 = vmatprep.subr.mxu0 0.0
        %892 = vmatpush1.xpose.msra.mxu0 0.0
        %893 = vmatprep.subr.mxu0 0.0
        %894 = vmatpush1.xpose.msra.mxu0 0.0
        %895 = vmatprep.subr.mxu0 0.0
        %896 = vmatpush1.xpose.msra.mxu0 0.0
        %897 = vmatprep.subr.mxu0 0.0
        %898 = vmatpush1.xpose.msra.mxu0 0.0
        %899 = vmatprep.subr.mxu0 0.0
        %900 = vmatpush1.xpose.msra.mxu0 0.0
        %901 = vmatprep.subr.mxu0 0.0
        %902 = vmatpush1.xpose.msra.mxu0 0.0
        %903 = vmatprep.subr.mxu0 0.0
        %904 = vmatpush1.xpose.msra.mxu0 0.0
        %905 = vmatprep.subr.mxu0 0.0
        %906 = vmatpush1.xpose.msra.mxu0 0.0
        %907 = vmatprep.subr.mxu0 0.0
        %908 = vmatpush1.xpose.msra.mxu0 0.0
        %909 = vmatprep.subr.mxu0 0.0
        %910 = vmatpush1.xpose.msra.mxu0 0.0
        %911 = vmatprep.subr.mxu0 0.0
        %912 = vmatpush1.xpose.msra.mxu0 0.0
        %913 = vmatprep.subr.mxu0 0.0
        %914 = vmatpush1.xpose.msra.mxu0 0.0
        %915 = vmatprep.subr.mxu0 0.0
        %916 = vmatpush1.xpose.msra.mxu0 0.0
        %917 = vmatprep.subr.mxu0 0.0
        %918 = vmatpush1.xpose.msra.mxu0 0.0
        %919 = vmatprep.subr.mxu0 0.0
        %920 = vmatpush1.xpose.msra.mxu0 0.0
        %921 = vmatprep.subr.mxu0 0.0
        %922 = vmatpush1.xpose.msra.mxu0 0.0
        %923 = vmatprep.subr.mxu0 0.0
        %924 = vmatpush1.xpose.msra.mxu0 0.0
        %925 = vmatprep.subr.mxu0 0.0
        %926 = vmatpush1.xpose.msra.mxu0 0.0
        %927 = vmatprep.subr.mxu0 0.0
        %928 = vmatpush1.xpose.msra.mxu0 0.0
        %929 = vmatprep.subr.mxu0 0.0
        %930 = vmatpush1.xpose.msra.mxu0 0.0
        %931 = vmatprep.subr.mxu0 0.0
        %932 = vmatpush1.xpose.msra.mxu0 0.0
        %933 = vmatprep.subr.mxu0 0.0
        %934 = vmatpush1.xpose.msra.mxu0 0.0
        %935 = vmatprep.subr.mxu0 0.0
        %936 = vmatpush1.xpose.msra.mxu0 0.0
        %937 = vmatprep.subr.mxu0 0.0
        %938 = vmatpush1.xpose.msra.mxu0 0.0
        %939 = vmatprep.subr.mxu0 0.0
        %940 = vmatpush1.xpose.msra.mxu0 0.0
        %941 = vmatprep.subr.mxu0 0.0
        %942 = vmatpush1.xpose.msra.mxu0 0.0
        %943 = vmatprep.subr.mxu0 0.0
        %944 = vmatpush1.xpose.msra.mxu0 0.0
        %945 = vmatprep.subr.mxu0 0.0
        %946 = vmatpush1.xpose.msra.mxu0 0.0
        %947 = vmatprep.mubr.f32.mxu0 0.0
        %948 = vmatmul.mubr.f32.gmra.mrb[0].mxu0 %v438
        %v949 = vpop.f32.mrb[0].mxu0
        %v950 = vadd.f32 0.0, %v949
        %v951 = vpop.f32.mrb[0].mxu0
        %952 = vdwg.mxu0
        %vm953 = vcmask 64512
        %v954 = vsel %vm953, %v950, -inf
        %955 = vmax.xlane.f32.xlu0 %v954
        %v956 = vpop.xlane.xlu0 %955
        %v957 = vsub.f32 %v950, %v956
        %v958 = vmul.f32 %v957, 1.442695
        %v959 = vpow.pop %v958
        %v960 = vsel %vm953, %v959, 0.0
        %961 = vadd.xlane.f32.xlu0 %v960
        %v962 = vpop.xlane.xlu0 %961
        %v963 = vrcp.pop %v962
        %v964 = vmul.f32 %v959, %v963
        %v966 = vsel %vm953, %v964, 0
        %968 = vmatprep.subr.mxu0 0.0
        %969 = vmatpush1.msra.mxu0 %v808
        %970 = vmatprep.subr.mxu0 0.0
        %971 = vmatpush1.msra.mxu0 0.0
        %972 = vmatprep.subr.mxu0 0.0
        %973 = vmatpush1.msra.mxu0 0.0
        %974 = vmatprep.subr.mxu0 0.0
        %975 = vmatpush1.msra.mxu0 0.0
        %976 = vmatprep.subr.mxu0 0.0
        %977 = vmatpush1.msra.mxu0 0.0
        %978 = vmatprep.subr.mxu0 0.0
        %979 = vmatpush1.msra.mxu0 0.0
        %980 = vmatprep.subr.mxu0 0.0
        %981 = vmatpush1.msra.mxu0 0.0
        %982 = vmatprep.subr.mxu0 0.0
        %983 = vmatpush1.msra.mxu0 0.0
        %984 = vmatprep.subr.mxu0 0.0
        %985 = vmatpush1.msra.mxu0 0.0
        %986 = vmatprep.subr.mxu0 0.0
        %987 = vmatpush1.msra.mxu0 0.0
        %988 = vmatprep.subr.mxu0 0.0
        %989 = vmatpush1.msra.mxu0 0.0
        %990 = vmatprep.subr.mxu0 0.0
        %991 = vmatpush1.msra.mxu0 0.0
        %992 = vmatprep.subr.mxu0 0.0
        %993 = vmatpush1.msra.mxu0 0.0
        %994 = vmatprep.subr.mxu0 0.0
        %995 = vmatpush1.msra.mxu0 0.0
        %996 = vmatprep.subr.mxu0 0.0
        %997 = vmatpush1.msra.mxu0 0.0
        %998 = vmatprep.subr.mxu0 0.0
        %999 = vmatpush1.msra.mxu0 0.0
        %1000 = vmatprep.subr.mxu0 0.0
        %1001 = vmatpush1.msra.mxu0 0.0
        %1002 = vmatprep.subr.mxu0 0.0
        %1003 = vmatpush1.msra.mxu0 0.0
        %1004 = vmatprep.subr.mxu0 0.0
        %1005 = vmatpush1.msra.mxu0 0.0
        %1006 = vmatprep.subr.mxu0 0.0
        %1007 = vmatpush1.msra.mxu0 0.0
        %1008 = vmatprep.subr.mxu0 0.0
        %1009 = vmatpush1.msra.mxu0 0.0
        %1010 = vmatprep.subr.mxu0 0.0
        %1011 = vmatpush1.msra.mxu0 0.0
        %1012 = vmatprep.subr.mxu0 0.0
        %1013 = vmatpush1.msra.mxu0 0.0
        %1014 = vmatprep.subr.mxu0 0.0
        %1015 = vmatpush1.msra.mxu0 0.0
        %1016 = vmatprep.subr.mxu0 0.0
        %1017 = vmatpush1.msra.mxu0 0.0
        %1018 = vmatprep.subr.mxu0 0.0
        %1019 = vmatpush1.msra.mxu0 0.0
        %1020 = vmatprep.subr.mxu0 0.0
        %1021 = vmatpush1.msra.mxu0 0.0
        %1022 = vmatprep.subr.mxu0 0.0
        %1023 = vmatpush1.msra.mxu0 0.0
        %1024 = vmatprep.subr.mxu0 0.0
        %1025 = vmatpush1.msra.mxu0 0.0
        %1026 = vmatprep.subr.mxu0 0.0
        %1027 = vmatpush1.msra.mxu0 0.0
        %1028 = vmatprep.subr.mxu0 0.0
        %1029 = vmatpush1.msra.mxu0 0.0
        %1030 = vmatprep.subr.mxu0 0.0
        %1031 = vmatpush1.msra.mxu0 0.0
        %1032 = vmatprep.mubr.f32.mxu0 0.0
        %1033 = vmatmul.mubr.f32.gmra.mrb[0].mxu0 %v966
        %v1034 = vpop.f32.mrb[0].mxu0
        %v1035 = vadd.f32 0.0, %v1034
        %v1036 = vpop.f32.mrb[0].mxu0
        %1037 = vdwg.mxu0
        %1038 = vmatprep.subr.mxu0 0.0
        %1039 = vmatpush1.xpose.msra.mxu0 %v625
        %1040 = vmatprep.subr.mxu0 0.0
        %1041 = vmatpush1.xpose.msra.mxu0 0.0
        %1042 = vmatprep.subr.mxu0 0.0
        %1043 = vmatpush1.xpose.msra.mxu0 0.0
        %1044 = vmatprep.subr.mxu0 0.0
        %1045 = vmatpush1.xpose.msra.mxu0 0.0
        %1046 = vmatprep.subr.mxu0 0.0
        %1047 = vmatpush1.xpose.msra.mxu0 0.0
        %1048 = vmatprep.subr.mxu0 0.0
        %1049 = vmatpush1.xpose.msra.mxu0 0.0
        %1050 = vmatprep.subr.mxu0 0.0
        %1051 = vmatpush1.xpose.msra.mxu0 0.0
        %1052 = vmatprep.subr.mxu0 0.0
        %1053 = vmatpush1.xpose.msra.mxu0 0.0
        %1054 = vmatprep.subr.mxu0 0.0
        %1055 = vmatpush1.xpose.msra.mxu0 0.0
        %1056 = vmatprep.subr.mxu0 0.0
        %1057 = vmatpush1.xpose.msra.mxu0 0.0
        %1058 = vmatprep.subr.mxu0 0.0
        %1059 = vmatpush1.xpose.msra.mxu0 0.0
        %1060 = vmatprep.subr.mxu0 0.0
        %1061 = vmatpush1.xpose.msra.mxu0 0.0
        %1062 = vmatprep.subr.mxu0 0.0
        %1063 = vmatpush1.xpose.msra.mxu0 0.0
        %1064 = vmatprep.subr.mxu0 0.0
        %1065 = vmatpush1.xpose.msra.mxu0 0.0
        %1066 = vmatprep.subr.mxu0 0.0
        %1067 = vmatpush1.xpose.msra.mxu0 0.0
        %1068 = vmatprep.subr.mxu0 0.0
        %1069 = vmatpush1.xpose.msra.mxu0 0.0
        %1070 = vmatprep.subr.mxu0 0.0
        %1071 = vmatpush1.xpose.msra.mxu0 0.0
        %1072 = vmatprep.subr.mxu0 0.0
        %1073 = vmatpush1.xpose.msra.mxu0 0.0
        %1074 = vmatprep.subr.mxu0 0.0
        %1075 = vmatpush1.xpose.msra.mxu0 0.0
        %1076 = vmatprep.subr.mxu0 0.0
        %1077 = vmatpush1.xpose.msra.mxu0 0.0
        %1078 = vmatprep.subr.mxu0 0.0
        %1079 = vmatpush1.xpose.msra.mxu0 0.0
        %1080 = vmatprep.subr.mxu0 0.0
        %1081 = vmatpush1.xpose.msra.mxu0 0.0
        %1082 = vmatprep.subr.mxu0 0.0
        %1083 = vmatpush1.xpose.msra.mxu0 0.0
        %1084 = vmatprep.subr.mxu0 0.0
        %1085 = vmatpush1.xpose.msra.mxu0 0.0
        %1086 = vmatprep.subr.mxu0 0.0
        %1087 = vmatpush1.xpose.msra.mxu0 0.0
        %1088 = vmatprep.subr.mxu0 0.0
        %1089 = vmatpush1.xpose.msra.mxu0 0.0
        %1090 = vmatprep.subr.mxu0 0.0
        %1091 = vmatpush1.xpose.msra.mxu0 0.0
        %1092 = vmatprep.subr.mxu0 0.0
        %1093 = vmatpush1.xpose.msra.mxu0 0.0
        %1094 = vmatprep.subr.mxu0 0.0
        %1095 = vmatpush1.xpose.msra.mxu0 0.0
        %1096 = vmatprep.subr.mxu0 0.0
        %1097 = vmatpush1.xpose.msra.mxu0 0.0
        %1098 = vmatprep.subr.mxu0 0.0
        %1099 = vmatpush1.xpose.msra.mxu0 0.0
        %1100 = vmatprep.subr.mxu0 0.0
        %1101 = vmatpush1.xpose.msra.mxu0 0.0
        %1102 = vmatprep.mubr.f32.mxu0 0.0
        %1103 = vmatmul.mubr.f32.gmra.mrb[0].mxu0 %v440
        %v1104 = vpop.f32.mrb[0].mxu0
        %v1105 = vadd.f32 0.0, %v1104
        %v1106 = vpop.f32.mrb[0].mxu0
        %1107 = vdwg.mxu0
        %v1108 = vsel %vm953, %v1105, -inf
        %1109 = vmax.xlane.f32.xlu0 %v1108
        %v1110 = vpop.xlane.xlu0 %1109
        %v1111 = vsub.f32 %v1105, %v1110
        %v1112 = vmul.f32 %v1111, 1.442695
        %v1113 = vpow.pop %v1112
        %v1114 = vsel %vm953, %v1113, 0.0
        %1115 = vadd.xlane.f32.xlu0 %v1114
        %v1116 = vpop.xlane.xlu0 %1115
        %v1117 = vrcp.pop %v1116
        %v1118 = vmul.f32 %v1113, %v1117
        %v1120 = vsel %vm953, %v1118, 0
        %1122 = vmatprep.subr.mxu0 0.0
        %1123 = vmatpush1.msra.mxu0 %v810
        %1124 = vmatprep.subr.mxu0 0.0
        %1125 = vmatpush1.msra.mxu0 0.0
        %1126 = vmatprep.subr.mxu0 0.0
        %1127 = vmatpush1.msra.mxu0 0.0
        %1128 = vmatprep.subr.mxu0 0.0
        %1129 = vmatpush1.msra.mxu0 0.0
        %1130 = vmatprep.subr.mxu0 0.0
        %1131 = vmatpush1.msra.mxu0 0.0
        %1132 = vmatprep.subr.mxu0 0.0
        %1133 = vmatpush1.msra.mxu0 0.0
        %1134 = vmatprep.subr.mxu0 0.0
        %1135 = vmatpush1.msra.mxu0 0.0
        %1136 = vmatprep.subr.mxu0 0.0
        %1137 = vmatpush1.msra.mxu0 0.0
        %1138 = vmatprep.subr.mxu0 0.0
        %1139 = vmatpush1.msra.mxu0 0.0
        %1140 = vmatprep.subr.mxu0 0.0
        %1141 = vmatpush1.msra.mxu0 0.0
        %1142 = vmatprep.subr.mxu0 0.0
        %1143 = vmatpush1.msra.mxu0 0.0
        %1144 = vmatprep.subr.mxu0 0.0
        %1145 = vmatpush1.msra.mxu0 0.0
        %1146 = vmatprep.subr.mxu0 0.0
        %1147 = vmatpush1.msra.mxu0 0.0
        %1148 = vmatprep.subr.mxu0 0.0
        %1149 = vmatpush1.msra.mxu0 0.0
        %1150 = vmatprep.subr.mxu0 0.0
        %1151 = vmatpush1.msra.mxu0 0.0
        %1152 = vmatprep.subr.mxu0 0.0
        %1153 = vmatpush1.msra.mxu0 0.0
        %1154 = vmatprep.subr.mxu0 0.0
        %1155 = vmatpush1.msra.mxu0 0.0
        %1156 = vmatprep.subr.mxu0 0.0
        %1157 = vmatpush1.msra.mxu0 0.0
        %1158 = vmatprep.subr.mxu0 0.0
        %1159 = vmatpush1.msra.mxu0 0.0
        %1160 = vmatprep.subr.mxu0 0.0
        %1161 = vmatpush1.msra.mxu0 0.0
        %1162 = vmatprep.subr.mxu0 0.0
        %1163 = vmatpush1.msra.mxu0 0.0
        %1164 = vmatprep.subr.mxu0 0.0
        %1165 = vmatpush1.msra.mxu0 0.0
        %1166 = vmatprep.subr.mxu0 0.0
        %1167 = vmatpush1.msra.mxu0 0.0
        %1168 = vmatprep.subr.mxu0 0.0
        %1169 = vmatpush1.msra.mxu0 0.0
        %1170 = vmatprep.subr.mxu0 0.0
        %1171 = vmatpush1.msra.mxu0 0.0
        %1172 = vmatprep.subr.mxu0 0.0
        %1173 = vmatpush1.msra.mxu0 0.0
        %1174 = vmatprep.subr.mxu0 0.0
        %1175 = vmatpush1.msra.mxu0 0.0
        %1176 = vmatprep.subr.mxu0 0.0
        %1177 = vmatpush1.msra.mxu0 0.0
        %1178 = vmatprep.subr.mxu0 0.0
        %1179 = vmatpush1.msra.mxu0 0.0
        %1180 = vmatprep.subr.mxu0 0.0
        %1181 = vmatpush1.msra.mxu0 0.0
        %1182 = vmatprep.subr.mxu0 0.0
        %1183 = vmatpush1.msra.mxu0 0.0
        %1184 = vmatprep.subr.mxu0 0.0
        %1185 = vmatpush1.msra.mxu0 0.0
        %1186 = vmatprep.mubr.f32.mxu0 0.0
        %1187 = vmatmul.mubr.f32.gmra.mrb[0].mxu0 %v1120
        %v1188 = vpop.f32.mrb[0].mxu0
        %v1189 = vadd.f32 0.0, %v1188
        %v1190 = vpop.f32.mrb[0].mxu0
        %1191 = vdwg.mxu0
        %1192 = vmatprep.subr.mxu0 0.0
        %1193 = vmatpush1.xpose.msra.mxu0 %v694
        %1194 = vmatprep.subr.mxu0 0.0
        %1195 = vmatpush1.xpose.msra.mxu0 0.0
        %1196 = vmatprep.subr.mxu0 0.0
        %1197 = vmatpush1.xpose.msra.mxu0 0.0
        %1198 = vmatprep.subr.mxu0 0.0
        %1199 = vmatpush1.xpose.msra.mxu0 0.0
        %1200 = vmatprep.subr.mxu0 0.0
        %1201 = vmatpush1.xpose.msra.mxu0 0.0
        %1202 = vmatprep.subr.mxu0 0.0
        %1203 = vmatpush1.xpose.msra.mxu0 0.0
        %1204 = vmatprep.subr.mxu0 0.0
        %1205 = vmatpush1.xpose.msra.mxu0 0.0
        %1206 = vmatprep.subr.mxu0 0.0
        %1207 = vmatpush1.xpose.msra.mxu0 0.0
        %1208 = vmatprep.subr.mxu0 0.0
        %1209 = vmatpush1.xpose.msra.mxu0 0.0
        %1210 = vmatprep.subr.mxu0 0.0
        %1211 = vmatpush1.xpose.msra.mxu0 0.0
        %1212 = vmatprep.subr.mxu0 0.0
        %1213 = vmatpush1.xpose.msra.mxu0 0.0
        %1214 = vmatprep.subr.mxu0 0.0
        %1215 = vmatpush1.xpose.msra.mxu0 0.0
        %1216 = vmatprep.subr.mxu0 0.0
        %1217 = vmatpush1.xpose.msra.mxu0 0.0
        %1218 = vmatprep.subr.mxu0 0.0
        %1219 = vmatpush1.xpose.msra.mxu0 0.0
        %1220 = vmatprep.subr.mxu0 0.0
        %1221 = vmatpush1.xpose.msra.mxu0 0.0
        %1222 = vmatprep.subr.mxu0 0.0
        %1223 = vmatpush1.xpose.msra.mxu0 0.0
        %1224 = vmatprep.subr.mxu0 0.0
        %1225 = vmatpush1.xpose.msra.mxu0 0.0
        %1226 = vmatprep.subr.mxu0 0.0
        %1227 = vmatpush1.xpose.msra.mxu0 0.0
        %1228 = vmatprep.subr.mxu0 0.0
        %1229 = vmatpush1.xpose.msra.mxu0 0.0
        %1230 = vmatprep.subr.mxu0 0.0
        %1231 = vmatpush1.xpose.msra.mxu0 0.0
        %1232 = vmatprep.subr.mxu0 0.0
        %1233 = vmatpush1.xpose.msra.mxu0 0.0
        %1234 = vmatprep.subr.mxu0 0.0
        %1235 = vmatpush1.xpose.msra.mxu0 0.0
        %1236 = vmatprep.subr.mxu0 0.0
        %1237 = vmatpush1.xpose.msra.mxu0 0.0
        %1238 = vmatprep.subr.mxu0 0.0
        %1239 = vmatpush1.xpose.msra.mxu0 0.0
        %1240 = vmatprep.subr.mxu0 0.0
        %1241 = vmatpush1.xpose.msra.mxu0 0.0
        %1242 = vmatprep.subr.mxu0 0.0
        %1243 = vmatpush1.xpose.msra.mxu0 0.0
        %1244 = vmatprep.subr.mxu0 0.0
        %1245 = vmatpush1.xpose.msra.mxu0 0.0
        %1246 = vmatprep.subr.mxu0 0.0
        %1247 = vmatpush1.xpose.msra.mxu0 0.0
        %1248 = vmatprep.subr.mxu0 0.0
        %1249 = vmatpush1.xpose.msra.mxu0 0.0
        %1250 = vmatprep.subr.mxu0 0.0
        %1251 = vmatpush1.xpose.msra.mxu0 0.0
        %1252 = vmatprep.subr.mxu0 0.0
        %1253 = vmatpush1.xpose.msra.mxu0 0.0
        %1254 = vmatprep.subr.mxu0 0.0
        %1255 = vmatpush1.xpose.msra.mxu0 0.0
        %1256 = vmatprep.mubr.f32.mxu0 0.0
        %1257 = vmatmul.mubr.f32.gmra.mrb[0].mxu0 %v509
        %v1258 = vpop.f32.mrb[0].mxu0
        %v1259 = vadd.f32 0.0, %v1258
        %v1260 = vpop.f32.mrb[0].mxu0
        %1261 = vdwg.mxu0
        %v1262 = vsel %vm953, %v1259, -inf
        %1263 = vmax.xlane.f32.xlu0 %v1262
        %v1264 = vpop.xlane.xlu0 %1263
        %v1265 = vsub.f32 %v1259, %v1264
        %v1266 = vmul.f32 %v1265, 1.442695
        %v1267 = vpow.pop %v1266
        %v1268 = vsel %vm953, %v1267, 0.0
        %1269 = vadd.xlane.f32.xlu0 %v1268
        %v1270 = vpop.xlane.xlu0 %1269
        %v1271 = vrcp.pop %v1270
        %v1272 = vmul.f32 %v1267, %v1271
        %v1274 = vsel %vm953, %v1272, 0
        %1276 = vmatprep.subr.mxu0 0.0
        %1277 = vmatpush1.msra.mxu0 %v879
        %1278 = vmatprep.subr.mxu0 0.0
        %1279 = vmatpush1.msra.mxu0 0.0
        %1280 = vmatprep.subr.mxu0 0.0
        %1281 = vmatpush1.msra.mxu0 0.0
        %1282 = vmatprep.subr.mxu0 0.0
        %1283 = vmatpush1.msra.mxu0 0.0
        %1284 = vmatprep.subr.mxu0 0.0
        %1285 = vmatpush1.msra.mxu0 0.0
        %1286 = vmatprep.subr.mxu0 0.0
        %1287 = vmatpush1.msra.mxu0 0.0
        %1288 = vmatprep.subr.mxu0 0.0
        %1289 = vmatpush1.msra.mxu0 0.0
        %1290 = vmatprep.subr.mxu0 0.0
        %1291 = vmatpush1.msra.mxu0 0.0
        %1292 = vmatprep.subr.mxu0 0.0
        %1293 = vmatpush1.msra.mxu0 0.0
        %1294 = vmatprep.subr.mxu0 0.0
        %1295 = vmatpush1.msra.mxu0 0.0
        %1296 = vmatprep.subr.mxu0 0.0
        %1297 = vmatpush1.msra.mxu0 0.0
        %1298 = vmatprep.subr.mxu0 0.0
        %1299 = vmatpush1.msra.mxu0 0.0
        %1300 = vmatprep.subr.mxu0 0.0
        %1301 = vmatpush1.msra.mxu0 0.0
        %1302 = vmatprep.subr.mxu0 0.0
        %1303 = vmatpush1.msra.mxu0 0.0
        %1304 = vmatprep.subr.mxu0 0.0
        %1305 = vmatpush1.msra.mxu0 0.0
        %1306 = vmatprep.subr.mxu0 0.0
        %1307 = vmatpush1.msra.mxu0 0.0
        %1308 = vmatprep.subr.mxu0 0.0
        %1309 = vmatpush1.msra.mxu0 0.0
        %1310 = vmatprep.subr.mxu0 0.0
        %1311 = vmatpush1.msra.mxu0 0.0
        %1312 = vmatprep.subr.mxu0 0.0
        %1313 = vmatpush1.msra.mxu0 0.0
        %1314 = vmatprep.subr.mxu0 0.0
        %1315 = vmatpush1.msra.mxu0 0.0
        %1316 = vmatprep.subr.mxu0 0.0
        %1317 = vmatpush1.msra.mxu0 0.0
        %1318 = vmatprep.subr.mxu0 0.0
        %1319 = vmatpush1.msra.mxu0 0.0
        %1320 = vmatprep.subr.mxu0 0.0
        %1321 = vmatpush1.msra.mxu0 0.0
        %1322 = vmatprep.subr.mxu0 0.0
        %1323 = vmatpush1.msra.mxu0 0.0
        %1324 = vmatprep.subr.mxu0 0.0
        %1325 = vmatpush1.msra.mxu0 0.0
        %1326 = vmatprep.subr.mxu0 0.0
        %1327 = vmatpush1.msra.mxu0 0.0
        %1328 = vmatprep.subr.mxu0 0.0
        %1329 = vmatpush1.msra.mxu0 0.0
        %1330 = vmatprep.subr.mxu0 0.0
        %1331 = vmatpush1.msra.mxu0 0.0
        %1332 = vmatprep.subr.mxu0 0.0
        %1333 = vmatpush1.msra.mxu0 0.0
        %1334 = vmatprep.subr.mxu0 0.0
        %1335 = vmatpush1.msra.mxu0 0.0
        %1336 = vmatprep.subr.mxu0 0.0
        %1337 = vmatpush1.msra.mxu0 0.0
        %1338 = vmatprep.subr.mxu0 0.0
        %1339 = vmatpush1.msra.mxu0 0.0
        %1340 = vmatprep.mubr.f32.mxu0 0.0
        %1341 = vmatmul.mubr.f32.gmra.mrb[0].mxu0 %v1274
        %v1342 = vpop.f32.mrb[0].mxu0
        %v1343 = vadd.f32 0.0, %v1342
        %v1344 = vpop.f32.mrb[0].mxu0
        %1345 = vdwg.mxu0
        %1346 = vmatprep.subr.mxu0 0.0
        %1347 = vmatpush1.xpose.msra.mxu0 %v696
        %1348 = vmatprep.subr.mxu0 0.0
        %1349 = vmatpush1.xpose.msra.mxu0 0.0
        %1350 = vmatprep.subr.mxu0 0.0
        %1351 = vmatpush1.xpose.msra.mxu0 0.0
        %1352 = vmatprep.subr.mxu0 0.0
        %1353 = vmatpush1.xpose.msra.mxu0 0.0
        %1354 = vmatprep.subr.mxu0 0.0
        %1355 = vmatpush1.xpose.msra.mxu0 0.0
        %1356 = vmatprep.subr.mxu0 0.0
        %1357 = vmatpush1.xpose.msra.mxu0 0.0
        %1358 = vmatprep.subr.mxu0 0.0
        %1359 = vmatpush1.xpose.msra.mxu0 0.0
        %1360 = vmatprep.subr.mxu0 0.0
        %1361 = vmatpush1.xpose.msra.mxu0 0.0
        %1362 = vmatprep.subr.mxu0 0.0
        %1363 = vmatpush1.xpose.msra.mxu0 0.0
        %1364 = vmatprep.subr.mxu0 0.0
        %1365 = vmatpush1.xpose.msra.mxu0 0.0
        %1366 = vmatprep.subr.mxu0 0.0
        %1367 = vmatpush1.xpose.msra.mxu0 0.0
        %1368 = vmatprep.subr.mxu0 0.0
        %1369 = vmatpush1.xpose.msra.mxu0 0.0
        %1370 = vmatprep.subr.mxu0 0.0
        %1371 = vmatpush1.xpose.msra.mxu0 0.0
        %1372 = vmatprep.subr.mxu0 0.0
        %1373 = vmatpush1.xpose.msra.mxu0 0.0
        %1374 = vmatprep.subr.mxu0 0.0
        %1375 = vmatpush1.xpose.msra.mxu0 0.0
        %1376 = vmatprep.subr.mxu0 0.0
        %1377 = vmatpush1.xpose.msra.mxu0 0.0
        %1378 = vmatprep.subr.mxu0 0.0
        %1379 = vmatpush1.xpose.msra.mxu0 0.0
        %1380 = vmatprep.subr.mxu0 0.0
        %1381 = vmatpush1.xpose.msra.mxu0 0.0
        %1382 = vmatprep.subr.mxu0 0.0
        %1383 = vmatpush1.xpose.msra.mxu0 0.0
        %1384 = vmatprep.subr.mxu0 0.0
        %1385 = vmatpush1.xpose.msra.mxu0 0.0
        %1386 = vmatprep.subr.mxu0 0.0
        %1387 = vmatpush1.xpose.msra.mxu0 0.0
        %1388 = vmatprep.subr.mxu0 0.0
        %1389 = vmatpush1.xpose.msra.mxu0 0.0
        %1390 = vmatprep.subr.mxu0 0.0
        %1391 = vmatpush1.xpose.msra.mxu0 0.0
        %1392 = vmatprep.subr.mxu0 0.0
        %1393 = vmatpush1.xpose.msra.mxu0 0.0
        %1394 = vmatprep.subr.mxu0 0.0
        %1395 = vmatpush1.xpose.msra.mxu0 0.0
        %1396 = vmatprep.subr.mxu0 0.0
        %1397 = vmatpush1.xpose.msra.mxu0 0.0
        %1398 = vmatprep.subr.mxu0 0.0
        %1399 = vmatpush1.xpose.msra.mxu0 0.0
        %1400 = vmatprep.subr.mxu0 0.0
        %1401 = vmatpush1.xpose.msra.mxu0 0.0
        %1402 = vmatprep.subr.mxu0 0.0
        %1403 = vmatpush1.xpose.msra.mxu0 0.0
        %1404 = vmatprep.subr.mxu0 0.0
        %1405 = vmatpush1.xpose.msra.mxu0 0.0
        %1406 = vmatprep.subr.mxu0 0.0
        %1407 = vmatpush1.xpose.msra.mxu0 0.0
        %1408 = vmatprep.subr.mxu0 0.0
        %1409 = vmatpush1.xpose.msra.mxu0 0.0
        %1410 = vmatprep.mubr.f32.mxu0 0.0
        %1411 = vmatmul.mubr.f32.gmra.mrb[0].mxu0 %v511
        %v1412 = vpop.f32.mrb[0].mxu0
        %v1413 = vadd.f32 0.0, %v1412
        %v1414 = vpop.f32.mrb[0].mxu0
        %1415 = vdwg.mxu0
        %v1416 = vsel %vm953, %v1413, -inf
        %1417 = vmax.xlane.f32.xlu0 %v1416
        %v1418 = vpop.xlane.xlu0 %1417
        %v1419 = vsub.f32 %v1413, %v1418
        %v1420 = vmul.f32 %v1419, 1.442695
        %v1421 = vpow.pop %v1420
        %v1422 = vsel %vm953, %v1421, 0.0
        %1423 = vadd.xlane.f32.xlu0 %v1422
        %v1424 = vpop.xlane.xlu0 %1423
        %v1425 = vrcp.pop %v1424
        %v1426 = vmul.f32 %v1421, %v1425
        %v1428 = vsel %vm953, %v1426, 0
        %1430 = vmatprep.subr.mxu0 0.0
        %1431 = vmatpush1.msra.mxu0 %v881
        %1432 = vmatprep.subr.mxu0 0.0
        %1433 = vmatpush1.msra.mxu0 0.0
        %1434 = vmatprep.subr.mxu0 0.0
        %1435 = vmatpush1.msra.mxu0 0.0
        %1436 = vmatprep.subr.mxu0 0.0
        %1437 = vmatpush1.msra.mxu0 0.0
        %1438 = vmatprep.subr.mxu0 0.0
        %1439 = vmatpush1.msra.mxu0 0.0
        %1440 = vmatprep.subr.mxu0 0.0
        %1441 = vmatpush1.msra.mxu0 0.0
        %1442 = vmatprep.subr.mxu0 0.0
        %1443 = vmatpush1.msra.mxu0 0.0
        %1444 = vmatprep.subr.mxu0 0.0
        %1445 = vmatpush1.msra.mxu0 0.0
        %1446 = vmatprep.subr.mxu0 0.0
        %1447 = vmatpush1.msra.mxu0 0.0
        %1448 = vmatprep.subr.mxu0 0.0
        %1449 = vmatpush1.msra.mxu0 0.0
        %1450 = vmatprep.subr.mxu0 0.0
        %1451 = vmatpush1.msra.mxu0 0.0
        %1452 = vmatprep.subr.mxu0 0.0
        %1453 = vmatpush1.msra.mxu0 0.0
        %1454 = vmatprep.subr.mxu0 0.0
        %1455 = vmatpush1.msra.mxu0 0.0
        %1456 = vmatprep.subr.mxu0 0.0
        %1457 = vmatpush1.msra.mxu0 0.0
        %1458 = vmatprep.subr.mxu0 0.0
        %1459 = vmatpush1.msra.mxu0 0.0
        %1460 = vmatprep.subr.mxu0 0.0
        %1461 = vmatpush1.msra.mxu0 0.0
        %1462 = vmatprep.subr.mxu0 0.0
        %1463 = vmatpush1.msra.mxu0 0.0
        %1464 = vmatprep.subr.mxu0 0.0
        %1465 = vmatpush1.msra.mxu0 0.0
        %1466 = vmatprep.subr.mxu0 0.0
        %1467 = vmatpush1.msra.mxu0 0.0
        %1468 = vmatprep.subr.mxu0 0.0
        %1469 = vmatpush1.msra.mxu0 0.0
        %1470 = vmatprep.subr.mxu0 0.0
        %1471 = vmatpush1.msra.mxu0 0.0
        %1472 = vmatprep.subr.mxu0 0.0
        %1473 = vmatpush1.msra.mxu0 0.0
        %1474 = vmatprep.subr.mxu0 0.0
        %1475 = vmatpush1.msra.mxu0 0.0
        %1476 = vmatprep.subr.mxu0 0.0
        %1477 = vmatpush1.msra.mxu0 0.0
        %1478 = vmatprep.subr.mxu0 0.0
        %1479 = vmatpush1.msra.mxu0 0.0
        %1480 = vmatprep.subr.mxu0 0.0
        %1481 = vmatpush1.msra.mxu0 0.0
        %1482 = vmatprep.subr.mxu0 0.0
        %1483 = vmatpush1.msra.mxu0 0.0
        %1484 = vmatprep.subr.mxu0 0.0
        %1485 = vmatpush1.msra.mxu0 0.0
        %1486 = vmatprep.subr.mxu0 0.0
        %1487 = vmatpush1.msra.mxu0 0.0
        %1488 = vmatprep.subr.mxu0 0.0
        %1489 = vmatpush1.msra.mxu0 0.0
        %1490 = vmatprep.subr.mxu0 0.0
        %1491 = vmatpush1.msra.mxu0 0.0
        %1492 = vmatprep.subr.mxu0 0.0
        %1493 = vmatpush1.msra.mxu0 0.0
        %1494 = vmatprep.mubr.f32.mxu0 0.0
        %1495 = vmatmul.mubr.f32.gmra.mrb[0].mxu0 %v1428
        %v1496 = vpop.f32.mrb[0].mxu0
        %v1497 = vadd.f32 0.0, %v1496
        %v1498 = vpop.f32.mrb[0].mxu0
        %1499 = vdwg.mxu0
        %1500 = vst [vmem:[%s325] sm:$0xff] %v1035
        %1501 = vst [vmem:[%s325 + $0x8] sm:$0xff] %v1189
        %1502 = vst [vmem:[%s325 + $0x10] sm:$0xff] %v1343
        %1503 = vst [vmem:[%s325 + $0x18] sm:$0xff] %v1497
        %s1504 = sand.u32 %s154, 1
        %s1505 = scalar_lea.sflag [#allocation4], %s1504
        %s1506 = sand.u32 %s154, 1
        %s1507 = smul.addr %s1506, 32
        %s1508 = scalar_lea.vmem [#allocation10], %s1507
        // Predicated region
        $region57: #{tpu_custom_call.1} parent=39 // pred_check
          %p1509 = pneg %p164
        $region58: #{tpu_custom_call.1} parent=39 // pred_check_branch
          %1511 = sbr.rel (%p1509) target = $region60
        $region59: #{tpu_custom_call.1} parent=39 // pred_region
          %s1513 = ssub.s32 512, 512
          %1514 = vsyncadd %s1505, %s1513
          %s1515 = smul.addr %s26, 4
          %s1516 = smul.addr %s1515, 128
          %s1517 = scalar_lea.hbm %s5, %s1516
          %s1519 = sshll.u32 %s1508, 4
          %s1520 = int_to_ptr.vmem [resolvable:$true] %s1519
          %1522 = dma.vmem_to_hbm [thread:$0]  %s1520, 512, %s1517, %s1505
        $region60: #{tpu_custom_call.1} parent=39 // pred_fallthru
          _
      $region40: #{tpu_custom_call.1} parent=5 // pred_fallthru
        _
      %p1523 = scmp.le.s32.totalorder 2, %s21
      // Predicated region
      $region61: #{tpu_custom_call.1} parent=5 // pred_check
        %p1524 = pneg %p1523
      $region62: #{tpu_custom_call.1} parent=5 // pred_check_branch
        %1526 = sbr.rel (%p1524) target = $region64
      $region63: #{tpu_custom_call.1} parent=5 // pred_region
        %s1527 = ssub.s32 %s21, 2
        // Predicated region
        $region65: #{tpu_custom_call.1} parent=63 // pred_check
          %p1528 = pneg %p170
        $region66: #{tpu_custom_call.1} parent=63 // pred_check_branch
          %1530 = sbr.rel (%p1528) target = $region68
        $region67: #{tpu_custom_call.1} parent=63 // pred_region
          %s1531 = sand.u32 %s155, 1
          %s1532 = scalar_lea.sflag [#allocation4], %s1531
          %s1533 = sand.u32 %s155, 1
          %s1534 = smul.addr %s1533, 32
          %s1535 = scalar_lea.vmem [#allocation10], %s1534
          %1536 = dma.done %s1532, 512
        $region68: #{tpu_custom_call.1} parent=63 // pred_fallthru
          _
      $region64: #{tpu_custom_call.1} parent=5 // pred_fallthru
        _
    $region6: #{tpu_custom_call.1} parent=1 // loop_footer
      %s25 = sadd.s32 1, %s21
    $region7: #{tpu_custom_call.1} parent=1 // loop_footer_branch
      %20 = sbr.rel target = $region3
    $region8: #{tpu_custom_call.1} parent=1 // loop_exit
      _
    %1537 = vsyncpa [#allocation3], 1
    %s1538 = scalar_lea.sflag [#allocation3], 1
    %1539 = vsyncpa %s1538, 1
    %1540 = vsyncpa [#allocation6], 1
    %s1541 = scalar_lea.sflag [#allocation6], 1
    %1542 = vsyncpa %s1541, 1
    %1543 = vsyncpa [#allocation9], 1
    %1544 = vsyncpa [#allocation4], 1
    %s1545 = scalar_lea.sflag [#allocation4], 1
    %1546 = vsyncpa %s1545, 1

</llo_original>
